<compile_context>
chip_gen: v6e
topology: v6e:2x2x1
jax: 0.10.0
libtpu: 0.0.40
codegen_flags: <defaults>
</compile_context>

<pallas_src>
import numpy as np
import jax
import jax.numpy as jnp
from jax.experimental import pallas as pl
from jax.experimental.pallas import tpu as pltpu

S = 5          # spatial size (5x5), fixed by the module (f1 = Linear(8 * 5 * 5, ...))
NW = 256       # common lane width of every packed weight block (>= max feature count)
ALIGN = 16     # bf16 sublane tile -> every packed block starts on a tile boundary

# (weight, bias) packed-block names, in forward order: conv0, conv1, conv2, fc1, fc2.
_LAYERS = (("w0", "b0"), ("w1", "b1"), ("w2", "b2"), ("wf1", "bf1"), ("wf2", "bf2"))


# ------------------------------ fused kernel -------------------------------

def make_discriminator_kernel(off):
    """off[name] = (static row offset, row count) inside the packed weight buffer."""

    def kernel(x_ref, wp_ref, o_ref):
        a = x_ref[...]                                            # [B, C0*25] f32
        n_layers = len(_LAYERS)
        for i, (wname, bname) in enumerate(_LAYERS):
            rw, k = off[wname]                                    # static offsets
            rb, _ = off[bname]
            # bf16 operands, f32 accumulation on the MXU; K == valid feature count.
            y = jnp.dot(a[:, :k].astype(jnp.bfloat16),
                        wp_ref[rw:rw + k, :],
                        preferred_element_type=jnp.float32)
            y = y + wp_ref[rb:rb + 1, :].astype(jnp.float32)      # bias row, broadcast
            a = jnp.maximum(y, 0.0) if i < n_layers - 1 else y    # no ReLU after fc2
        # a[:, 0:2] holds the two logits; 2-class softmax == sigmoid of the difference.
        p1 = 1.0 / (1.0 + jnp.exp(a[:, 0:1] - a[:, 1:2]))
        o_ref[:, 0:1] = 1.0 - p1
        o_ref[:, 1:2] = p1

    return kernel


def make_discriminator_forward(off):
    kernel = make_discriminator_kernel(off)

    def forward(wp, e1, e2, e3, e4):
        # e1, e2, e3 are accepted but unused, exactly like the PyTorch forward.
        del e1, e2, e3
        B = e4.shape[0]
        assert e4.shape[2] == S and e4.shape[3] == S
        assert e4.shape[1] * S * S == off["w0"][1]
        # NCHW flatten -> lanes ordered (c, h, w); no transpose needed anywhere.
        x2d = e4.reshape(B, -1)

        flops = 2 * B * NW * sum(off[w][1] for w, _ in _LAYERS)
        bytes_accessed = (int(x2d.size) * x2d.dtype.itemsize
                          + int(wp.size) * wp.dtype.itemsize + B * 2 * 4)
        vmem = pl.BlockSpec(memory_space=pltpu.MemorySpace.VMEM)
        return pl.pallas_call(
            kernel,
            out_shape=jax.ShapeDtypeStruct((B, 2), jnp.float32),
            in_specs=[vmem, vmem],
            out_specs=vmem,
            compiler_params=pltpu.CompilerParams(
                # let XLA fold the activation flatten into the Pallas input DMA
                allow_input_fusion=[True, False]),
            cost_estimate=pl.CostEstimate(flops=flops, transcendentals=B,
                                          bytes_accessed=bytes_accessed),
        )(x2d, wp)

    return forward


# ------------------- one-time parameter packing (offline) -------------------

def _banded_conv_matrix(Wt):
    """Conv2d(3x3, stride 1, pad 1) on a 5x5 grid as one matmul.

    rows = (c_in, h_in, w_in)  [matches NCHW flatten], cols = (c_out, h_out, w_out).
    """
    Wt = np.asarray(Wt, np.float32)
    Cout, Cin = Wt.shape[0], Wt.shape[1]
    M = np.zeros((Cin, S * S, Cout, S * S), np.float32)
    for kh in range(3):
        for kw in range(3):
            wslice = Wt[:, :, kh, kw].T                     # [Cin, Cout]
            for ho in range(S):
                hi = ho + kh - 1
                if not 0 <= hi < S:
                    continue
                for wo in range(S):
                    wi = wo + kw - 1
                    if not 0 <= wi < S:
                        continue
                    M[:, hi * S + wi, :, ho * S + wo] = wslice
    return M.reshape(Cin * S * S, Cout * S * S)


def pack_params(tp):
    """Torch-layout params -> (one bf16 [rows, NW] buffer, static row offsets)."""
    (cw0, cb0), (cw1, cb1), (cw2, cb2) = tp["convs"]
    mats = {
        "w0": _banded_conv_matrix(cw0),
        "w1": _banded_conv_matrix(cw1),
        "w2": _banded_conv_matrix(cw2),
        # torch .view(-1, 8*5*5) flattens NCHW -> (c, h, w), same as our lane order.
        "wf1": np.asarray(tp["w1"], np.float32).T,
        "wf2": np.asarray(tp["w2"], np.float32).T,
        "b0": np.repeat(np.asarray(cb0, np.float32), S * S)[None, :],
        "b1": np.repeat(np.asarray(cb1, np.float32), S * S)[None, :],
        "b2": np.repeat(np.asarray(cb2, np.float32), S * S)[None, :],
        "bf1": np.asarray(tp["b1"], np.float32)[None, :],
        "bf2": np.asarray(tp["b2"], np.float32)[None, :],
    }
    order = [name for pair in _LAYERS for name in pair]
    off, row = {}, 0
    for name in order:
        r, c = mats[name].shape
        assert c <= NW, (name, c)
        off[name] = (row, r)
        row += -(-r // ALIGN) * ALIGN            # keep every block 16-row aligned
    wp = np.zeros((row, NW), np.float32)
    for name in order:
        start, r = off[name]
        wp[start:start + r, :mats[name].shape[1]] = mats[name]
    return jnp.asarray(wp, jnp.bfloat16), off


def init_torch_params(key, para_reduce=8):
    """Random params in PyTorch layout (conv [Cout, Cin, 3, 3], linear [out, in])."""
    chans = [512 // para_reduce, 64 // para_reduce, 32 // para_reduce, 8]
    hidden = 64 // para_reduce
    convs = []
    for cin, cout in zip(chans[:-1], chans[1:]):
        key, kw_, kb_ = jax.random.split(key, 3)
        w = jax.random.normal(kw_, (cout, cin, 3, 3), jnp.float32) / np.sqrt(9.0 * cin)
        b = jax.random.normal(kb_, (cout,), jnp.float32) * 0.01
        convs.append((w, b))
    key, k1, k2, k3, k4 = jax.random.split(key, 5)
    w1 = jax.random.normal(k1, (hidden, 8 * S * S), jnp.float32) / np.sqrt(8.0 * S * S)
    b1 = jax.random.normal(k2, (hidden,), jnp.float32) * 0.01
    w2 = jax.random.normal(k3, (2, hidden), jnp.float32) / np.sqrt(float(hidden))
    b2 = jax.random.normal(k4, (2,), jnp.float32) * 0.01
    return {"convs": convs, "w1": w1, "b1": b1, "w2": w2, "b2": b2}


# ---------------------------- pure-JAX reference ----------------------------

def discriminator_reference(tp, e4):
    x = e4
    for (w, b) in tp["convs"]:
        x = jax.lax.conv_general_dilated(
            x, w, window_strides=(1, 1), padding=((1, 1), (1, 1)),
            dimension_numbers=("NCHW", "OIHW", "NCHW"),
            precision=jax.lax.Precision.HIGHEST)
        x = jax.nn.relu(x + b.reshape(1, -1, 1, 1))
    feat = x.reshape(x.shape[0], -1)                  # torch .view(-1, 8*5*5) on NCHW
    h = jax.nn.relu(feat @ tp["w1"].T + tp["b1"])
    logits = h @ tp["w2"].T + tp["b2"]
    return jax.nn.softmax(logits, axis=1)


# --------------------------------- main ------------------------------------

if __name__ == "__main__":
    para_reduce = 8                  # small channel counts, structure unchanged
    B = 2
    key = jax.random.PRNGKey(0)
    key, kp, ke = jax.random.split(key, 3)
    tparams = init_torch_params(kp, para_reduce=para_reduce)
    wp, off = pack_params(tparams)

    # e4 is what the forward actually consumes: [B, 512//para_reduce, 5, 5] (NCHW).
    e4 = jax.random.normal(ke, (B, 512 // para_reduce, S, S), jnp.float32)
    # e1..e3 are accepted but unused (same as the PyTorch forward); small dummies.
    e1 = jnp.zeros((B, 4, 8, 8), jnp.float32)
    e2 = jnp.zeros((B, 4, 8, 8), jnp.float32)
    e3 = jnp.zeros((B, 4, 8, 8), jnp.float32)

    fwd = jax.jit(make_discriminator_forward(off))
    out = jax.block_until_ready(fwd(wp, e1, e2, e3, e4))
    ref = jax.block_until_ready(discriminator_reference(tparams, e4))

    assert out.shape == (B, 2)
    assert bool(jnp.all(jnp.isfinite(out)))
    assert bool(jnp.all(jnp.abs(jnp.sum(out, axis=1) - 1.0) < 1e-5))
    # bf16 matmul operands (f32 accumulation) vs the f32 / Precision.HIGHEST reference.
    assert bool(jnp.allclose(out, ref, rtol=0.0, atol=1.5e-2)), (out, ref)
    print("KERNEL_OK")
</pallas_src>

<mosaic_0001>
module attributes {stable_mosaic.version = 11 : i64} {
  func.func @kernel(%arg0: memref<2x1600xf32, #tpu.memory_space<vmem>>, %arg1: memref<2224x256xbf16, #tpu.memory_space<vmem>>, %arg2: memref<2x2xf32, #tpu.memory_space<vmem>>) attributes {dimension_semantics = [], scalar_prefetch = 0 : i64, scratch_operands = 0 : i64, tpu.core_type = #tpu.core_type<tc>} {
    %c0 = arith.constant 0 : index
    %c0_0 = arith.constant 0 : index
    %0 = vector.load %arg0[%c0, %c0_0] : memref<2x1600xf32, #tpu.memory_space<vmem>>, vector<2x1600xf32>
    %1 = arith.truncf %0 : vector<2x1600xf32> to vector<2x1600xbf16>
    %c0_1 = arith.constant 0 : index
    %c0_2 = arith.constant 0 : index
    %2 = vector.load %arg1[%c0_1, %c0_2] : memref<2224x256xbf16, #tpu.memory_space<vmem>>, vector<1600x256xbf16>
    %cst = arith.constant dense<0.000000e+00> : vector<2x256xf32>
    %3 = tpu.matmul %1, %2, %cst {dimension_numbers = #tpu.dot_dimension_numbers<[1], [0], [0], [1], [0, 0, 1, 1], [], []>} : vector<2x1600xbf16>, vector<1600x256xbf16>, vector<2x256xf32> -> vector<2x256xf32>
    %c1600 = arith.constant 1600 : index
    %c0_3 = arith.constant 0 : index
    %4 = vector.load %arg1[%c1600, %c0_3] : memref<2224x256xbf16, #tpu.memory_space<vmem>>, vector<1x256xbf16>
    %5 = arith.extf %4 : vector<1x256xbf16> to vector<1x256xf32>
    %6 = vector.broadcast %5 : vector<1x256xf32> to vector<2x256xf32>
    %7 = arith.addf %3, %6 : vector<2x256xf32>
    %cst_4 = arith.constant 0.000000e+00 : f32
    %8 = vector.broadcast %cst_4 : f32 to vector<2x256xf32>
    %9 = arith.maximumf %7, %8 : vector<2x256xf32>
    %10 = vector.extract_strided_slice %9 {offsets = [0, 0], sizes = [2, 200], strides = [1, 1]} : vector<2x256xf32> to vector<2x200xf32>
    %11 = arith.truncf %10 : vector<2x200xf32> to vector<2x200xbf16>
    %c1616 = arith.constant 1616 : index
    %c0_5 = arith.constant 0 : index
    %12 = vector.load %arg1[%c1616, %c0_5] : memref<2224x256xbf16, #tpu.memory_space<vmem>>, vector<200x256xbf16>
    %cst_6 = arith.constant dense<0.000000e+00> : vector<2x256xf32>
    %13 = tpu.matmul %11, %12, %cst_6 {dimension_numbers = #tpu.dot_dimension_numbers<[1], [0], [0], [1], [0, 0, 1, 1], [], []>} : vector<2x200xbf16>, vector<200x256xbf16>, vector<2x256xf32> -> vector<2x256xf32>
    %c1824 = arith.constant 1824 : index
    %c0_7 = arith.constant 0 : index
    %14 = vector.load %arg1[%c1824, %c0_7] : memref<2224x256xbf16, #tpu.memory_space<vmem>>, vector<1x256xbf16>
    %15 = arith.extf %14 : vector<1x256xbf16> to vector<1x256xf32>
    %16 = vector.broadcast %15 : vector<1x256xf32> to vector<2x256xf32>
    %17 = arith.addf %13, %16 : vector<2x256xf32>
    %cst_8 = arith.constant 0.000000e+00 : f32
    %18 = vector.broadcast %cst_8 : f32 to vector<2x256xf32>
    %19 = arith.maximumf %17, %18 : vector<2x256xf32>
    %20 = vector.extract_strided_slice %19 {offsets = [0, 0], sizes = [2, 100], strides = [1, 1]} : vector<2x256xf32> to vector<2x100xf32>
    %21 = arith.truncf %20 : vector<2x100xf32> to vector<2x100xbf16>
    %c1840 = arith.constant 1840 : index
    %c0_9 = arith.constant 0 : index
    %22 = vector.load %arg1[%c1840, %c0_9] : memref<2224x256xbf16, #tpu.memory_space<vmem>>, vector<100x256xbf16>
    %cst_10 = arith.constant dense<0.000000e+00> : vector<2x256xf32>
    %23 = tpu.matmul %21, %22, %cst_10 {dimension_numbers = #tpu.dot_dimension_numbers<[1], [0], [0], [1], [0, 0, 1, 1], [], []>} : vector<2x100xbf16>, vector<100x256xbf16>, vector<2x256xf32> -> vector<2x256xf32>
    %c1952 = arith.constant 1952 : index
    %c0_11 = arith.constant 0 : index
    %24 = vector.load %arg1[%c1952, %c0_11] : memref<2224x256xbf16, #tpu.memory_space<vmem>>, vector<1x256xbf16>
    %25 = arith.extf %24 : vector<1x256xbf16> to vector<1x256xf32>
    %26 = vector.broadcast %25 : vector<1x256xf32> to vector<2x256xf32>
    %27 = arith.addf %23, %26 : vector<2x256xf32>
    %cst_12 = arith.constant 0.000000e+00 : f32
    %28 = vector.broadcast %cst_12 : f32 to vector<2x256xf32>
    %29 = arith.maximumf %27, %28 : vector<2x256xf32>
    %30 = vector.extract_strided_slice %29 {offsets = [0, 0], sizes = [2, 200], strides = [1, 1]} : vector<2x256xf32> to vector<2x200xf32>
    %31 = arith.truncf %30 : vector<2x200xf32> to vector<2x200xbf16>
    %c1968 = arith.constant 1968 : index
    %c0_13 = arith.constant 0 : index
    %32 = vector.load %arg1[%c1968, %c0_13] : memref<2224x256xbf16, #tpu.memory_space<vmem>>, vector<200x256xbf16>
    %cst_14 = arith.constant dense<0.000000e+00> : vector<2x256xf32>
    %33 = tpu.matmul %31, %32, %cst_14 {dimension_numbers = #tpu.dot_dimension_numbers<[1], [0], [0], [1], [0, 0, 1, 1], [], []>} : vector<2x200xbf16>, vector<200x256xbf16>, vector<2x256xf32> -> vector<2x256xf32>
    %c2176 = arith.constant 2176 : index
    %c0_15 = arith.constant 0 : index
    %34 = vector.load %arg1[%c2176, %c0_15] : memref<2224x256xbf16, #tpu.memory_space<vmem>>, vector<1x256xbf16>
    %35 = arith.extf %34 : vector<1x256xbf16> to vector<1x256xf32>
    %36 = vector.broadcast %35 : vector<1x256xf32> to vector<2x256xf32>
    %37 = arith.addf %33, %36 : vector<2x256xf32>
    %cst_16 = arith.constant 0.000000e+00 : f32
    %38 = vector.broadcast %cst_16 : f32 to vector<2x256xf32>
    %39 = arith.maximumf %37, %38 : vector<2x256xf32>
    %40 = vector.extract_strided_slice %39 {offsets = [0, 0], sizes = [2, 8], strides = [1, 1]} : vector<2x256xf32> to vector<2x8xf32>
    %41 = arith.truncf %40 : vector<2x8xf32> to vector<2x8xbf16>
    %c2192 = arith.constant 2192 : index
    %c0_17 = arith.constant 0 : index
    %42 = vector.load %arg1[%c2192, %c0_17] : memref<2224x256xbf16, #tpu.memory_space<vmem>>, vector<8x256xbf16>
    %cst_18 = arith.constant dense<0.000000e+00> : vector<2x256xf32>
    %43 = tpu.matmul %41, %42, %cst_18 {dimension_numbers = #tpu.dot_dimension_numbers<[1], [0], [0], [1], [0, 0, 1, 1], [], []>} : vector<2x8xbf16>, vector<8x256xbf16>, vector<2x256xf32> -> vector<2x256xf32>
    %c2208 = arith.constant 2208 : index
    %c0_19 = arith.constant 0 : index
    %44 = vector.load %arg1[%c2208, %c0_19] : memref<2224x256xbf16, #tpu.memory_space<vmem>>, vector<1x256xbf16>
    %45 = arith.extf %44 : vector<1x256xbf16> to vector<1x256xf32>
    %46 = vector.broadcast %45 : vector<1x256xf32> to vector<2x256xf32>
    %47 = arith.addf %43, %46 : vector<2x256xf32>
    %48 = vector.extract_strided_slice %47 {offsets = [0, 0], sizes = [2, 1], strides = [1, 1]} : vector<2x256xf32> to vector<2x1xf32>
    %49 = vector.extract_strided_slice %47 {offsets = [0, 1], sizes = [2, 1], strides = [1, 1]} : vector<2x256xf32> to vector<2x1xf32>
    %50 = arith.subf %48, %49 : vector<2x1xf32>
    %51 = math.exp %50 : vector<2x1xf32>
    %cst_20 = arith.constant 1.000000e+00 : f32
    %52 = vector.broadcast %cst_20 : f32 to vector<2x1xf32>
    %53 = arith.addf %52, %51 : vector<2x1xf32>
    %cst_21 = arith.constant 1.000000e+00 : f32
    %54 = vector.broadcast %cst_21 : f32 to vector<2x1xf32>
    %55 = arith.divf %54, %53 : vector<2x1xf32>
    %cst_22 = arith.constant 1.000000e+00 : f32
    %56 = vector.broadcast %cst_22 : f32 to vector<2x1xf32>
    %57 = arith.subf %56, %55 : vector<2x1xf32>
    %c0_23 = arith.constant 0 : index
    %c0_24 = arith.constant 0 : index
    %58 = vector.load %arg2[%c0_23, %c0_24] : memref<2x2xf32, #tpu.memory_space<vmem>>, vector<2x1xf32>
    tpu.vector_store %arg2[%c0_23, %c0_24], %57 {strides = array<i32>} : memref<2x2xf32, #tpu.memory_space<vmem>>, vector<2x1xf32>,
    %c0_25 = arith.constant 0 : index
    %c1 = arith.constant 1 : index
    %59 = vector.load %arg2[%c0_25, %c1] : memref<2x2xf32, #tpu.memory_space<vmem>>, vector<2x1xf32>
    tpu.vector_store %arg2[%c0_25, %c1], %55 {strides = array<i32>} : memref<2x2xf32, #tpu.memory_space<vmem>>, vector<2x1xf32>,
    return
  }
}

</mosaic_0001>

<llo_original>
// kernel: forward.1
$region0: #{forward.1}
  #allocation0 [shape = 'u32[]', space=smem, size = 0x4, offset = 0x4, fixed_abs, tag = 'smem constant byte address 0x4 - core index']
  #allocation1 [shape = 'u32[144,128]{1,0:T(1,128)}', space=vmem, size = 0x12000, scoped, tag = 'internal scratch']
  %s0 = inlined_call_operand.vmem [shape: f32[2,1600], index: 0, kind: input, shape index: {}]
  %s1 = inlined_call_operand.hbm [shape: bf16[2224,256], index: 1, kind: input, shape index: {}]
  %s2 = inlined_call_operand.hbm [shape: f32[2,2], index: 2, kind: output, shape index: {}]
  %s3 = sld [smem:[#allocation0]]
  $region22: #{forward.1} parent=0
    _
  %s5 = ssub.s32 1, %s3
  %s6 = scalar_select 0, %s5, %s3
  $region1: #{forward.1} parent=0
    #allocation2 [shape = 'u8[1138688]{0}', space=vmem, size = 0x116000, scoped, tag = 'input window, operand 1, single buffered']
    #allocation3 [shape = 's32[1]{0}', space=sflag, size = 0x4, scoped, tag = 'scoped memory for forward.1']
    #allocation4 [shape = 's32[1]{0}', space=sflag, size = 0x4, scoped, tag = 'scoped memory for forward.1']
    #allocation5 [shape = 'u8[1024]{0}', space=vmem, size = 0x400, scoped, tag = 'output window, operand 0, single buffered']
    %7 = vsyncpa [#allocation3], 0
    %8 = vsyncpa [#allocation4], 0
    // Predicated region
    $region2: #{forward.1} parent=1 // pred_check
      _
    $region3: #{forward.1} parent=1 // pred_check_branch
      %10 = sbr.rel (0) target = $region5
    $region4: #{forward.1} parent=1 // pred_region
      _
    $region5: #{forward.1} parent=1 // pred_fallthru
      _
    // Predicated region
    $region6: #{forward.1} parent=1 // pred_check
      _
    $region7: #{forward.1} parent=1 // pred_check_branch
      %12 = sbr.rel (0) target = $region9
    $region8: #{forward.1} parent=1 // pred_region
      %s14 = ssub.s32 35584, 35584
      %15 = vsyncadd [#allocation3], %s14
      %s16 = sshll.u32 [#allocation2], 4
      %s17 = int_to_ptr.vmem [resolvable:$true] %s16
      %22 = dma.hbm_to_vmem [thread:$0]  %s1, 35584, %s17, [#allocation3], 128, 128, 8
    $region9: #{forward.1} parent=1 // pred_fallthru
      _
    // Predicated region
    $region10: #{forward.1} parent=1 // pred_check
      _
    $region11: #{forward.1} parent=1 // pred_check_branch
      %24 = sbr.rel (0) target = $region13
    $region12: #{forward.1} parent=1 // pred_region
      %25 = dma.done [#allocation3], 35584
    $region13: #{forward.1} parent=1 // pred_fallthru
      _
    %v27 = vld [vmem:[%s0] sm:$0xff]
    %v28 = vld [vmem:[%s0 + $0x8] sm:$0xff]
    %v29 = vld [vmem:[%s0 + $0x10] sm:$0xff]
    %v30 = vld [vmem:[%s0 + $0x18] sm:$0x3]
    %v35 = vcombine.high %v27, %v27
    %v37 = vunpack.c.l.s4 1983009808
    %v38 = vunpack.c.0.s8 %v37
    %v39 = vlaneseq
    %v40 = vshrl.u32 %v39, 7
    %v41 = vsub.s32 %v38, %v40
    %v42 = vrot.slane %v27, %v41
    %v44 = vunpack.c.l.s4 1983009808
    %v45 = vunpack.c.0.s8 %v44
    %v46 = vlaneseq
    %v47 = vshrl.u32 %v46, 7
    %v48 = vsub.s32 %v45, %v47
    %v49 = vrot.slane %v35, %v48
    %v50 = vcombine.high %v42, %v42
    %v51 = vcombine.high %v49, %v49
    %v52 = vcombine.high %v28, %v28
    %v54 = vunpack.c.l.s4 1983009808
    %v55 = vunpack.c.0.s8 %v54
    %v56 = vlaneseq
    %v57 = vshrl.u32 %v56, 7
    %v58 = vsub.s32 %v55, %v57
    %v59 = vrot.slane %v28, %v58
    %v61 = vunpack.c.l.s4 1983009808
    %v62 = vunpack.c.0.s8 %v61
    %v63 = vlaneseq
    %v64 = vshrl.u32 %v63, 7
    %v65 = vsub.s32 %v62, %v64
    %v66 = vrot.slane %v52, %v65
    %v67 = vcombine.high %v59, %v59
    %v68 = vcombine.high %v66, %v66
    %v69 = vcombine.high %v29, %v29
    %v71 = vunpack.c.l.s4 1983009808
    %v72 = vunpack.c.0.s8 %v71
    %v73 = vlaneseq
    %v74 = vshrl.u32 %v73, 7
    %v75 = vsub.s32 %v72, %v74
    %v76 = vrot.slane %v29, %v75
    %v78 = vunpack.c.l.s4 1983009808
    %v79 = vunpack.c.0.s8 %v78
    %v80 = vlaneseq
    %v81 = vshrl.u32 %v80, 7
    %v82 = vsub.s32 %v79, %v81
    %v83 = vrot.slane %v69, %v82
    %v84 = vcombine.high %v76, %v76
    %v85 = vcombine.high %v83, %v83
    %v87 = vunpack.c.l.s4 1983009808
    %v88 = vunpack.c.0.s8 %v87
    %v89 = vlaneseq
    %v90 = vshrl.u32 %v89, 7
    %v91 = vsub.s32 %v88, %v90
    %v92 = vrot.slane %v30, %v91
    %v106 = vpack.c.bf16 %v42, %v42
    %v107 = vpack.c.bf16 %v50, %v50
    %v108 = vpack.c.bf16 %v49, %v49
    %v109 = vpack.c.bf16 %v51, %v51
    %v110 = vpack.c.bf16 %v59, %v59
    %v111 = vpack.c.bf16 %v67, %v67
    %v112 = vpack.c.bf16 %v66, %v66
    %v113 = vpack.c.bf16 %v68, %v68
    %v114 = vpack.c.bf16 %v76, %v76
    %v115 = vpack.c.bf16 %v84, %v84
    %v116 = vpack.c.bf16 %v83, %v83
    %v117 = vpack.c.bf16 %v85, %v85
    %v118 = vpack.c.bf16 %v92, %v92
    %v119 = vld [vmem:[#allocation2] sm:$0xff]
    %v120 = vld [vmem:[#allocation2 + $0x8] sm:$0xff]
    %v121 = vld [vmem:[#allocation2 + $0x10] sm:$0xff]
    %v122 = vld [vmem:[#allocation2 + $0x18] sm:$0xff]
    %v123 = vld [vmem:[#allocation2 + $0x20] sm:$0xff]
    %v124 = vld [vmem:[#allocation2 + $0x28] sm:$0xff]
    %v125 = vld [vmem:[#allocation2 + $0x30] sm:$0xff]
    %v126 = vld [vmem:[#allocation2 + $0x38] sm:$0xff]
    %v127 = vld [vmem:[#allocation2 + $0x40] sm:$0xff]
    %v128 = vld [vmem:[#allocation2 + $0x48] sm:$0xff]
    %v129 = vld [vmem:[#allocation2 + $0x50] sm:$0xff]
    %v130 = vld [vmem:[#allocation2 + $0x58] sm:$0xff]
    %v131 = vld [vmem:[#allocation2 + $0x60] sm:$0xff]
    %v132 = vld [vmem:[#allocation2 + $0x68] sm:$0xff]
    %v133 = vld [vmem:[#allocation2 + $0x70] sm:$0xff]
    %v134 = vld [vmem:[#allocation2 + $0x78] sm:$0xff]
    %v135 = vld [vmem:[#allocation2 + $0x80] sm:$0xff]
    %v136 = vld [vmem:[#allocation2 + $0x88] sm:$0xff]
    %v137 = vld [vmem:[#allocation2 + $0x90] sm:$0xff]
    %v138 = vld [vmem:[#allocation2 + $0x98] sm:$0xff]
    %v139 = vld [vmem:[#allocation2 + $0xa0] sm:$0xff]
    %v140 = vld [vmem:[#allocation2 + $0xa8] sm:$0xff]
    %v141 = vld [vmem:[#allocation2 + $0xb0] sm:$0xff]
    %v142 = vld [vmem:[#allocation2 + $0xb8] sm:$0xff]
    %v143 = vld [vmem:[#allocation2 + $0xc0] sm:$0xff]
    %v144 = vld [vmem:[#allocation2 + $0xc8] sm:$0xff]
    %v145 = vld [vmem:[#allocation2 + $0xd0] sm:$0xff]
    %v146 = vld [vmem:[#allocation2 + $0xd8] sm:$0xff]
    %v147 = vld [vmem:[#allocation2 + $0xe0] sm:$0xff]
    %v148 = vld [vmem:[#allocation2 + $0xe8] sm:$0xff]
    %v149 = vld [vmem:[#allocation2 + $0xf0] sm:$0xff]
    %v150 = vld [vmem:[#allocation2 + $0xf8] sm:$0xff]
    %v151 = vld [vmem:[#allocation2 + $0x100] sm:$0xff]
    %v152 = vld [vmem:[#allocation2 + $0x108] sm:$0xff]
    %v153 = vld [vmem:[#allocation2 + $0x110] sm:$0xff]
    %v154 = vld [vmem:[#allocation2 + $0x118] sm:$0xff]
    %v155 = vld [vmem:[#allocation2 + $0x120] sm:$0xff]
    %v156 = vld [vmem:[#allocation2 + $0x128] sm:$0xff]
    %v157 = vld [vmem:[#allocation2 + $0x130] sm:$0xff]
    %v158 = vld [vmem:[#allocation2 + $0x138] sm:$0xff]
    %v159 = vld [vmem:[#allocation2 + $0x140] sm:$0xff]
    %v160 = vld [vmem:[#allocation2 + $0x148] sm:$0xff]
    %v161 = vld [vmem:[#allocation2 + $0x150] sm:$0xff]
    %v162 = vld [vmem:[#allocation2 + $0x158] sm:$0xff]
    %v163 = vld [vmem:[#allocation2 + $0x160] sm:$0xff]
    %v164 = vld [vmem:[#allocation2 + $0x168] sm:$0xff]
    %v165 = vld [vmem:[#allocation2 + $0x170] sm:$0xff]
    %v166 = vld [vmem:[#allocation2 + $0x178] sm:$0xff]
    %v167 = vld [vmem:[#allocation2 + $0x180] sm:$0xff]
    %v168 = vld [vmem:[#allocation2 + $0x188] sm:$0xff]
    %v169 = vld [vmem:[#allocation2 + $0x190] sm:$0xff]
    %v170 = vld [vmem:[#allocation2 + $0x198] sm:$0xff]
    %v171 = vld [vmem:[#allocation2 + $0x1a0] sm:$0xff]
    %v172 = vld [vmem:[#allocation2 + $0x1a8] sm:$0xff]
    %v173 = vld [vmem:[#allocation2 + $0x1b0] sm:$0xff]
    %v174 = vld [vmem:[#allocation2 + $0x1b8] sm:$0xff]
    %v175 = vld [vmem:[#allocation2 + $0x1c0] sm:$0xff]
    %v176 = vld [vmem:[#allocation2 + $0x1c8] sm:$0xff]
    %v177 = vld [vmem:[#allocation2 + $0x1d0] sm:$0xff]
    %v178 = vld [vmem:[#allocation2 + $0x1d8] sm:$0xff]
    %v179 = vld [vmem:[#allocation2 + $0x1e0] sm:$0xff]
    %v180 = vld [vmem:[#allocation2 + $0x1e8] sm:$0xff]
    %v181 = vld [vmem:[#allocation2 + $0x1f0] sm:$0xff]
    %v182 = vld [vmem:[#allocation2 + $0x1f8] sm:$0xff]
    %v183 = vld [vmem:[#allocation2 + $0x200] sm:$0xff]
    %v184 = vld [vmem:[#allocation2 + $0x208] sm:$0xff]
    %v185 = vld [vmem:[#allocation2 + $0x210] sm:$0xff]
    %v186 = vld [vmem:[#allocation2 + $0x218] sm:$0xff]
    %v187 = vld [vmem:[#allocation2 + $0x220] sm:$0xff]
    %v188 = vld [vmem:[#allocation2 + $0x228] sm:$0xff]
    %v189 = vld [vmem:[#allocation2 + $0x230] sm:$0xff]
    %v190 = vld [vmem:[#allocation2 + $0x238] sm:$0xff]
    %v191 = vld [vmem:[#allocation2 + $0x240] sm:$0xff]
    %v192 = vld [vmem:[#allocation2 + $0x248] sm:$0xff]
    %v193 = vld [vmem:[#allocation2 + $0x250] sm:$0xff]
    %v194 = vld [vmem:[#allocation2 + $0x258] sm:$0xff]
    %v195 = vld [vmem:[#allocation2 + $0x260] sm:$0xff]
    %v196 = vld [vmem:[#allocation2 + $0x268] sm:$0xff]
    %v197 = vld [vmem:[#allocation2 + $0x270] sm:$0xff]
    %v198 = vld [vmem:[#allocation2 + $0x278] sm:$0xff]
    %v199 = vld [vmem:[#allocation2 + $0x280] sm:$0xff]
    %v200 = vld [vmem:[#allocation2 + $0x288] sm:$0xff]
    %v201 = vld [vmem:[#allocation2 + $0x290] sm:$0xff]
    %v202 = vld [vmem:[#allocation2 + $0x298] sm:$0xff]
    %v203 = vld [vmem:[#allocation2 + $0x2a0] sm:$0xff]
    %v204 = vld [vmem:[#allocation2 + $0x2a8] sm:$0xff]
    %v205 = vld [vmem:[#allocation2 + $0x2b0] sm:$0xff]
    %v206 = vld [vmem:[#allocation2 + $0x2b8] sm:$0xff]
    %v207 = vld [vmem:[#allocation2 + $0x2c0] sm:$0xff]
    %v208 = vld [vmem:[#allocation2 + $0x2c8] sm:$0xff]
    %v209 = vld [vmem:[#allocation2 + $0x2d0] sm:$0xff]
    %v210 = vld [vmem:[#allocation2 + $0x2d8] sm:$0xff]
    %v211 = vld [vmem:[#allocation2 + $0x2e0] sm:$0xff]
    %v212 = vld [vmem:[#allocation2 + $0x2e8] sm:$0xff]
    %v213 = vld [vmem:[#allocation2 + $0x2f0] sm:$0xff]
    %v214 = vld [vmem:[#allocation2 + $0x2f8] sm:$0xff]
    %v215 = vld [vmem:[#allocation2 + $0x300] sm:$0xff]
    %v216 = vld [vmem:[#allocation2 + $0x308] sm:$0xff]
    %v217 = vld [vmem:[#allocation2 + $0x310] sm:$0xff]
    %v218 = vld [vmem:[#allocation2 + $0x318] sm:$0xff]
    %v219 = vld [vmem:[#allocation2 + $0x320] sm:$0xff]
    %v220 = vld [vmem:[#allocation2 + $0x328] sm:$0xff]
    %v221 = vld [vmem:[#allocation2 + $0x330] sm:$0xff]
    %v222 = vld [vmem:[#allocation2 + $0x338] sm:$0xff]
    %v223 = vld [vmem:[#allocation2 + $0x340] sm:$0xff]
    %v224 = vld [vmem:[#allocation2 + $0x348] sm:$0xff]
    %v225 = vld [vmem:[#allocation2 + $0x350] sm:$0xff]
    %v226 = vld [vmem:[#allocation2 + $0x358] sm:$0xff]
    %v227 = vld [vmem:[#allocation2 + $0x360] sm:$0xff]
    %v228 = vld [vmem:[#allocation2 + $0x368] sm:$0xff]
    %v229 = vld [vmem:[#allocation2 + $0x370] sm:$0xff]
    %v230 = vld [vmem:[#allocation2 + $0x378] sm:$0xff]
    %v231 = vld [vmem:[#allocation2 + $0x380] sm:$0xff]
    %v232 = vld [vmem:[#allocation2 + $0x388] sm:$0xff]
    %v233 = vld [vmem:[#allocation2 + $0x390] sm:$0xff]
    %v234 = vld [vmem:[#allocation2 + $0x398] sm:$0xff]
    %v235 = vld [vmem:[#allocation2 + $0x3a0] sm:$0xff]
    %v236 = vld [vmem:[#allocation2 + $0x3a8] sm:$0xff]
    %v237 = vld [vmem:[#allocation2 + $0x3b0] sm:$0xff]
    %v238 = vld [vmem:[#allocation2 + $0x3b8] sm:$0xff]
    %v239 = vld [vmem:[#allocation2 + $0x3c0] sm:$0xff]
    %v240 = vld [vmem:[#allocation2 + $0x3c8] sm:$0xff]
    %v241 = vld [vmem:[#allocation2 + $0x3d0] sm:$0xff]
    %v242 = vld [vmem:[#allocation2 + $0x3d8] sm:$0xff]
    %v243 = vld [vmem:[#allocation2 + $0x3e0] sm:$0xff]
    %v244 = vld [vmem:[#allocation2 + $0x3e8] sm:$0xff]
    %v245 = vld [vmem:[#allocation2 + $0x3f0] sm:$0xff]
    %v246 = vld [vmem:[#allocation2 + $0x3f8] sm:$0xff]
    %v247 = vld [vmem:[#allocation2 + $0x400] sm:$0xff]
    %v248 = vld [vmem:[#allocation2 + $0x408] sm:$0xff]
    %v249 = vld [vmem:[#allocation2 + $0x410] sm:$0xff]
    %v250 = vld [vmem:[#allocation2 + $0x418] sm:$0xff]
    %v251 = vld [vmem:[#allocation2 + $0x420] sm:$0xff]
    %v252 = vld [vmem:[#allocation2 + $0x428] sm:$0xff]
    %v253 = vld [vmem:[#allocation2 + $0x430] sm:$0xff]
    %v254 = vld [vmem:[#allocation2 + $0x438] sm:$0xff]
    %v255 = vld [vmem:[#allocation2 + $0x440] sm:$0xff]
    %v256 = vld [vmem:[#allocation2 + $0x448] sm:$0xff]
    %v257 = vld [vmem:[#allocation2 + $0x450] sm:$0xff]
    %v258 = vld [vmem:[#allocation2 + $0x458] sm:$0xff]
    %v259 = vld [vmem:[#allocation2 + $0x460] sm:$0xff]
    %v260 = vld [vmem:[#allocation2 + $0x468] sm:$0xff]
    %v261 = vld [vmem:[#allocation2 + $0x470] sm:$0xff]
    %v262 = vld [vmem:[#allocation2 + $0x478] sm:$0xff]
    %v263 = vld [vmem:[#allocation2 + $0x480] sm:$0xff]
    %v264 = vld [vmem:[#allocation2 + $0x488] sm:$0xff]
    %v265 = vld [vmem:[#allocation2 + $0x490] sm:$0xff]
    %v266 = vld [vmem:[#allocation2 + $0x498] sm:$0xff]
    %v267 = vld [vmem:[#allocation2 + $0x4a0] sm:$0xff]
    %v268 = vld [vmem:[#allocation2 + $0x4a8] sm:$0xff]
    %v269 = vld [vmem:[#allocation2 + $0x4b0] sm:$0xff]
    %v270 = vld [vmem:[#allocation2 + $0x4b8] sm:$0xff]
    %v271 = vld [vmem:[#allocation2 + $0x4c0] sm:$0xff]
    %v272 = vld [vmem:[#allocation2 + $0x4c8] sm:$0xff]
    %v273 = vld [vmem:[#allocation2 + $0x4d0] sm:$0xff]
    %v274 = vld [vmem:[#allocation2 + $0x4d8] sm:$0xff]
    %v275 = vld [vmem:[#allocation2 + $0x4e0] sm:$0xff]
    %v276 = vld [vmem:[#allocation2 + $0x4e8] sm:$0xff]
    %v277 = vld [vmem:[#allocation2 + $0x4f0] sm:$0xff]
    %v278 = vld [vmem:[#allocation2 + $0x4f8] sm:$0xff]
    %v279 = vld [vmem:[#allocation2 + $0x500] sm:$0xff]
    %v280 = vld [vmem:[#allocation2 + $0x508] sm:$0xff]
    %v281 = vld [vmem:[#allocation2 + $0x510] sm:$0xff]
    %v282 = vld [vmem:[#allocation2 + $0x518] sm:$0xff]
    %v283 = vld [vmem:[#allocation2 + $0x520] sm:$0xff]
    %v284 = vld [vmem:[#allocation2 + $0x528] sm:$0xff]
    %v285 = vld [vmem:[#allocation2 + $0x530] sm:$0xff]
    %v286 = vld [vmem:[#allocation2 + $0x538] sm:$0xff]
    %v287 = vld [vmem:[#allocation2 + $0x540] sm:$0xff]
    %v288 = vld [vmem:[#allocation2 + $0x548] sm:$0xff]
    %v289 = vld [vmem:[#allocation2 + $0x550] sm:$0xff]
    %v290 = vld [vmem:[#allocation2 + $0x558] sm:$0xff]
    %v291 = vld [vmem:[#allocation2 + $0x560] sm:$0xff]
    %v292 = vld [vmem:[#allocation2 + $0x568] sm:$0xff]
    %v293 = vld [vmem:[#allocation2 + $0x570] sm:$0xff]
    %v294 = vld [vmem:[#allocation2 + $0x578] sm:$0xff]
    %v295 = vld [vmem:[#allocation2 + $0x580] sm:$0xff]
    %v296 = vld [vmem:[#allocation2 + $0x588] sm:$0xff]
    %v297 = vld [vmem:[#allocation2 + $0x590] sm:$0xff]
    %v298 = vld [vmem:[#allocation2 + $0x598] sm:$0xff]
    %v299 = vld [vmem:[#allocation2 + $0x5a0] sm:$0xff]
    %v300 = vld [vmem:[#allocation2 + $0x5a8] sm:$0xff]
    %v301 = vld [vmem:[#allocation2 + $0x5b0] sm:$0xff]
    %v302 = vld [vmem:[#allocation2 + $0x5b8] sm:$0xff]
    %v303 = vld [vmem:[#allocation2 + $0x5c0] sm:$0xff]
    %v304 = vld [vmem:[#allocation2 + $0x5c8] sm:$0xff]
    %v305 = vld [vmem:[#allocation2 + $0x5d0] sm:$0xff]
    %v306 = vld [vmem:[#allocation2 + $0x5d8] sm:$0xff]
    %v307 = vld [vmem:[#allocation2 + $0x5e0] sm:$0xff]
    %v308 = vld [vmem:[#allocation2 + $0x5e8] sm:$0xff]
    %v309 = vld [vmem:[#allocation2 + $0x5f0] sm:$0xff]
    %v310 = vld [vmem:[#allocation2 + $0x5f8] sm:$0xff]
    %v311 = vld [vmem:[#allocation2 + $0x600] sm:$0xff]
    %v312 = vld [vmem:[#allocation2 + $0x608] sm:$0xff]
    %v313 = vld [vmem:[#allocation2 + $0x610] sm:$0xff]
    %v314 = vld [vmem:[#allocation2 + $0x618] sm:$0xff]
    %v315 = vld [vmem:[#allocation2 + $0x620] sm:$0xff]
    %v316 = vld [vmem:[#allocation2 + $0x628] sm:$0xff]
    %v317 = vld [vmem:[#allocation2 + $0x630] sm:$0xff]
    %v318 = vld [vmem:[#allocation2 + $0x638] sm:$0xff]
    %v319 = vld [vmem:[#allocation2 + $0x640] sm:$0x11]
    %v320 = vunpack.c.l.bf16 %v319
    %v321 = vunpack.c.h.bf16 %v319
    %v322 = vlaneseq
    %v323 = vshrl.u32 %v322, 7
    %v324 = vsub.s32 0, %v323
    %v325 = vrot.slane %v320, %v324
    %v326 = vlaneseq
    %v327 = vshrl.u32 %v326, 7
    %v328 = vsub.s32 0, %v327
    %v329 = vrot.slane %v321, %v328
    %v530 = vunpack.c.l.b16 %v119
    %v531 = vunpack.c.h.b16 %v119
    %v532 = vunpack.c.l.b16 %v120
    %v533 = vunpack.c.h.b16 %v120
    %v534 = vunpack.c.l.b16 %v121
    %v535 = vunpack.c.h.b16 %v121
    %v536 = vunpack.c.l.b16 %v122
    %v537 = vunpack.c.h.b16 %v122
    %v538 = vunpack.c.l.b16 %v123
    %v539 = vunpack.c.h.b16 %v123
    %v540 = vunpack.c.l.b16 %v124
    %v541 = vunpack.c.h.b16 %v124
    %v542 = vunpack.c.l.b16 %v125
    %v543 = vunpack.c.h.b16 %v125
    %v544 = vunpack.c.l.b16 %v126
    %v545 = vunpack.c.h.b16 %v126
    %v546 = vunpack.c.l.b16 %v127
    %v547 = vunpack.c.h.b16 %v127
    %v548 = vunpack.c.l.b16 %v128
    %v549 = vunpack.c.h.b16 %v128
    %v550 = vunpack.c.l.b16 %v129
    %v551 = vunpack.c.h.b16 %v129
    %v552 = vunpack.c.l.b16 %v130
    %v553 = vunpack.c.h.b16 %v130
    %v554 = vunpack.c.l.b16 %v131
    %v555 = vunpack.c.h.b16 %v131
    %v556 = vunpack.c.l.b16 %v132
    %v557 = vunpack.c.h.b16 %v132
    %v558 = vunpack.c.l.b16 %v133
    %v559 = vunpack.c.h.b16 %v133
    %v560 = vunpack.c.l.b16 %v134
    %v561 = vunpack.c.h.b16 %v134
    %v562 = vunpack.c.l.b16 %v135
    %v563 = vunpack.c.h.b16 %v135
    %v564 = vunpack.c.l.b16 %v136
    %v565 = vunpack.c.h.b16 %v136
    %v566 = vunpack.c.l.b16 %v137
    %v567 = vunpack.c.h.b16 %v137
    %v568 = vunpack.c.l.b16 %v138
    %v569 = vunpack.c.h.b16 %v138
    %v570 = vunpack.c.l.b16 %v139
    %v571 = vunpack.c.h.b16 %v139
    %v572 = vunpack.c.l.b16 %v140
    %v573 = vunpack.c.h.b16 %v140
    %v574 = vunpack.c.l.b16 %v141
    %v575 = vunpack.c.h.b16 %v141
    %v576 = vunpack.c.l.b16 %v142
    %v577 = vunpack.c.h.b16 %v142
    %v578 = vunpack.c.l.b16 %v143
    %v579 = vunpack.c.h.b16 %v143
    %v580 = vunpack.c.l.b16 %v144
    %v581 = vunpack.c.h.b16 %v144
    %v582 = vunpack.c.l.b16 %v145
    %v583 = vunpack.c.h.b16 %v145
    %v584 = vunpack.c.l.b16 %v146
    %v585 = vunpack.c.h.b16 %v146
    %v586 = vunpack.c.l.b16 %v147
    %v587 = vunpack.c.h.b16 %v147
    %v588 = vunpack.c.l.b16 %v148
    %v589 = vunpack.c.h.b16 %v148
    %v590 = vunpack.c.l.b16 %v149
    %v591 = vunpack.c.h.b16 %v149
    %v592 = vunpack.c.l.b16 %v150
    %v593 = vunpack.c.h.b16 %v150
    %v594 = vunpack.c.l.b16 %v151
    %v595 = vunpack.c.h.b16 %v151
    %v596 = vunpack.c.l.b16 %v152
    %v597 = vunpack.c.h.b16 %v152
    %v598 = vunpack.c.l.b16 %v153
    %v599 = vunpack.c.h.b16 %v153
    %v600 = vunpack.c.l.b16 %v154
    %v601 = vunpack.c.h.b16 %v154
    %v602 = vunpack.c.l.b16 %v155
    %v603 = vunpack.c.h.b16 %v155
    %v604 = vunpack.c.l.b16 %v156
    %v605 = vunpack.c.h.b16 %v156
    %v606 = vunpack.c.l.b16 %v157
    %v607 = vunpack.c.h.b16 %v157
    %v608 = vunpack.c.l.b16 %v158
    %v609 = vunpack.c.h.b16 %v158
    %v610 = vunpack.c.l.b16 %v159
    %v611 = vunpack.c.h.b16 %v159
    %v612 = vunpack.c.l.b16 %v160
    %v613 = vunpack.c.h.b16 %v160
    %v614 = vunpack.c.l.b16 %v161
    %v615 = vunpack.c.h.b16 %v161
    %v616 = vunpack.c.l.b16 %v162
    %v617 = vunpack.c.h.b16 %v162
    %v618 = vunpack.c.l.b16 %v163
    %v619 = vunpack.c.h.b16 %v163
    %v620 = vunpack.c.l.b16 %v164
    %v621 = vunpack.c.h.b16 %v164
    %v622 = vunpack.c.l.b16 %v165
    %v623 = vunpack.c.h.b16 %v165
    %v624 = vunpack.c.l.b16 %v166
    %v625 = vunpack.c.h.b16 %v166
    %v626 = vunpack.c.l.b16 %v167
    %v627 = vunpack.c.h.b16 %v167
    %v628 = vunpack.c.l.b16 %v168
    %v629 = vunpack.c.h.b16 %v168
    %v630 = vunpack.c.l.b16 %v169
    %v631 = vunpack.c.h.b16 %v169
    %v632 = vunpack.c.l.b16 %v170
    %v633 = vunpack.c.h.b16 %v170
    %v634 = vunpack.c.l.b16 %v171
    %v635 = vunpack.c.h.b16 %v171
    %v636 = vunpack.c.l.b16 %v172
    %v637 = vunpack.c.h.b16 %v172
    %v638 = vunpack.c.l.b16 %v173
    %v639 = vunpack.c.h.b16 %v173
    %v640 = vunpack.c.l.b16 %v174
    %v641 = vunpack.c.h.b16 %v174
    %v642 = vunpack.c.l.b16 %v175
    %v643 = vunpack.c.h.b16 %v175
    %v644 = vunpack.c.l.b16 %v176
    %v645 = vunpack.c.h.b16 %v176
    %v646 = vunpack.c.l.b16 %v177
    %v647 = vunpack.c.h.b16 %v177
    %v648 = vunpack.c.l.b16 %v178
    %v649 = vunpack.c.h.b16 %v178
    %v650 = vunpack.c.l.b16 %v179
    %v651 = vunpack.c.h.b16 %v179
    %v652 = vunpack.c.l.b16 %v180
    %v653 = vunpack.c.h.b16 %v180
    %v654 = vunpack.c.l.b16 %v181
    %v655 = vunpack.c.h.b16 %v181
    %v656 = vunpack.c.l.b16 %v182
    %v657 = vunpack.c.h.b16 %v182
    %v658 = vunpack.c.l.b16 %v183
    %v659 = vunpack.c.h.b16 %v183
    %v660 = vunpack.c.l.b16 %v184
    %v661 = vunpack.c.h.b16 %v184
    %v662 = vunpack.c.l.b16 %v185
    %v663 = vunpack.c.h.b16 %v185
    %v664 = vunpack.c.l.b16 %v186
    %v665 = vunpack.c.h.b16 %v186
    %v666 = vunpack.c.l.b16 %v187
    %v667 = vunpack.c.h.b16 %v187
    %v668 = vunpack.c.l.b16 %v188
    %v669 = vunpack.c.h.b16 %v188
    %v670 = vunpack.c.l.b16 %v189
    %v671 = vunpack.c.h.b16 %v189
    %v672 = vunpack.c.l.b16 %v190
    %v673 = vunpack.c.h.b16 %v190
    %v674 = vunpack.c.l.b16 %v191
    %v675 = vunpack.c.h.b16 %v191
    %v676 = vunpack.c.l.b16 %v192
    %v677 = vunpack.c.h.b16 %v192
    %v678 = vunpack.c.l.b16 %v193
    %v679 = vunpack.c.h.b16 %v193
    %v680 = vunpack.c.l.b16 %v194
    %v681 = vunpack.c.h.b16 %v194
    %v682 = vunpack.c.l.b16 %v195
    %v683 = vunpack.c.h.b16 %v195
    %v684 = vunpack.c.l.b16 %v196
    %v685 = vunpack.c.h.b16 %v196
    %v686 = vunpack.c.l.b16 %v197
    %v687 = vunpack.c.h.b16 %v197
    %v688 = vunpack.c.l.b16 %v198
    %v689 = vunpack.c.h.b16 %v198
    %v690 = vunpack.c.l.b16 %v199
    %v691 = vunpack.c.h.b16 %v199
    %v692 = vunpack.c.l.b16 %v200
    %v693 = vunpack.c.h.b16 %v200
    %v694 = vunpack.c.l.b16 %v201
    %v695 = vunpack.c.h.b16 %v201
    %v696 = vunpack.c.l.b16 %v202
    %v697 = vunpack.c.h.b16 %v202
    %v698 = vunpack.c.l.b16 %v203
    %v699 = vunpack.c.h.b16 %v203
    %v700 = vunpack.c.l.b16 %v204
    %v701 = vunpack.c.h.b16 %v204
    %v702 = vunpack.c.l.b16 %v205
    %v703 = vunpack.c.h.b16 %v205
    %v704 = vunpack.c.l.b16 %v206
    %v705 = vunpack.c.h.b16 %v206
    %v706 = vunpack.c.l.b16 %v207
    %v707 = vunpack.c.h.b16 %v207
    %v708 = vunpack.c.l.b16 %v208
    %v709 = vunpack.c.h.b16 %v208
    %v710 = vunpack.c.l.b16 %v209
    %v711 = vunpack.c.h.b16 %v209
    %v712 = vunpack.c.l.b16 %v210
    %v713 = vunpack.c.h.b16 %v210
    %v714 = vunpack.c.l.b16 %v211
    %v715 = vunpack.c.h.b16 %v211
    %v716 = vunpack.c.l.b16 %v212
    %v717 = vunpack.c.h.b16 %v212
    %v718 = vunpack.c.l.b16 %v213
    %v719 = vunpack.c.h.b16 %v213
    %v720 = vunpack.c.l.b16 %v214
    %v721 = vunpack.c.h.b16 %v214
    %v722 = vunpack.c.l.b16 %v215
    %v723 = vunpack.c.h.b16 %v215
    %v724 = vunpack.c.l.b16 %v216
    %v725 = vunpack.c.h.b16 %v216
    %v726 = vunpack.c.l.b16 %v217
    %v727 = vunpack.c.h.b16 %v217
    %v728 = vunpack.c.l.b16 %v218
    %v729 = vunpack.c.h.b16 %v218
    %v730 = vunpack.c.l.b16 %v219
    %v731 = vunpack.c.h.b16 %v219
    %v732 = vunpack.c.l.b16 %v220
    %v733 = vunpack.c.h.b16 %v220
    %v734 = vunpack.c.l.b16 %v221
    %v735 = vunpack.c.h.b16 %v221
    %v736 = vunpack.c.l.b16 %v222
    %v737 = vunpack.c.h.b16 %v222
    %v738 = vunpack.c.l.b16 %v223
    %v739 = vunpack.c.h.b16 %v223
    %v740 = vunpack.c.l.b16 %v224
    %v741 = vunpack.c.h.b16 %v224
    %v742 = vunpack.c.l.b16 %v225
    %v743 = vunpack.c.h.b16 %v225
    %v744 = vunpack.c.l.b16 %v226
    %v745 = vunpack.c.h.b16 %v226
    %v746 = vunpack.c.l.b16 %v227
    %v747 = vunpack.c.h.b16 %v227
    %v748 = vunpack.c.l.b16 %v228
    %v749 = vunpack.c.h.b16 %v228
    %v750 = vunpack.c.l.b16 %v229
    %v751 = vunpack.c.h.b16 %v229
    %v752 = vunpack.c.l.b16 %v230
    %v753 = vunpack.c.h.b16 %v230
    %v754 = vunpack.c.l.b16 %v231
    %v755 = vunpack.c.h.b16 %v231
    %v756 = vunpack.c.l.b16 %v232
    %v757 = vunpack.c.h.b16 %v232
    %v758 = vunpack.c.l.b16 %v233
    %v759 = vunpack.c.h.b16 %v233
    %v760 = vunpack.c.l.b16 %v234
    %v761 = vunpack.c.h.b16 %v234
    %v762 = vunpack.c.l.b16 %v235
    %v763 = vunpack.c.h.b16 %v235
    %v764 = vunpack.c.l.b16 %v236
    %v765 = vunpack.c.h.b16 %v236
    %v766 = vunpack.c.l.b16 %v237
    %v767 = vunpack.c.h.b16 %v237
    %v768 = vunpack.c.l.b16 %v238
    %v769 = vunpack.c.h.b16 %v238
    %v770 = vunpack.c.l.b16 %v239
    %v771 = vunpack.c.h.b16 %v239
    %v772 = vunpack.c.l.b16 %v240
    %v773 = vunpack.c.h.b16 %v240
    %v774 = vunpack.c.l.b16 %v241
    %v775 = vunpack.c.h.b16 %v241
    %v776 = vunpack.c.l.b16 %v242
    %v777 = vunpack.c.h.b16 %v242
    %v778 = vunpack.c.l.b16 %v243
    %v779 = vunpack.c.h.b16 %v243
    %v780 = vunpack.c.l.b16 %v244
    %v781 = vunpack.c.h.b16 %v244
    %v782 = vunpack.c.l.b16 %v245
    %v783 = vunpack.c.h.b16 %v245
    %v784 = vunpack.c.l.b16 %v246
    %v785 = vunpack.c.h.b16 %v246
    %v786 = vunpack.c.l.b16 %v247
    %v787 = vunpack.c.h.b16 %v247
    %v788 = vunpack.c.l.b16 %v248
    %v789 = vunpack.c.h.b16 %v248
    %v790 = vunpack.c.l.b16 %v249
    %v791 = vunpack.c.h.b16 %v249
    %v792 = vunpack.c.l.b16 %v250
    %v793 = vunpack.c.h.b16 %v250
    %v794 = vunpack.c.l.b16 %v251
    %v795 = vunpack.c.h.b16 %v251
    %v796 = vunpack.c.l.b16 %v252
    %v797 = vunpack.c.h.b16 %v252
    %v798 = vunpack.c.l.b16 %v253
    %v799 = vunpack.c.h.b16 %v253
    %v800 = vunpack.c.l.b16 %v254
    %v801 = vunpack.c.h.b16 %v254
    %v802 = vunpack.c.l.b16 %v255
    %v803 = vunpack.c.h.b16 %v255
    %v804 = vunpack.c.l.b16 %v256
    %v805 = vunpack.c.h.b16 %v256
    %v806 = vunpack.c.l.b16 %v257
    %v807 = vunpack.c.h.b16 %v257
    %v808 = vunpack.c.l.b16 %v258
    %v809 = vunpack.c.h.b16 %v258
    %v810 = vunpack.c.l.b16 %v259
    %v811 = vunpack.c.h.b16 %v259
    %v812 = vunpack.c.l.b16 %v260
    %v813 = vunpack.c.h.b16 %v260
    %v814 = vunpack.c.l.b16 %v261
    %v815 = vunpack.c.h.b16 %v261
    %v816 = vunpack.c.l.b16 %v262
    %v817 = vunpack.c.h.b16 %v262
    %v818 = vunpack.c.l.b16 %v263
    %v819 = vunpack.c.h.b16 %v263
    %v820 = vunpack.c.l.b16 %v264
    %v821 = vunpack.c.h.b16 %v264
    %v822 = vunpack.c.l.b16 %v265
    %v823 = vunpack.c.h.b16 %v265
    %v824 = vunpack.c.l.b16 %v266
    %v825 = vunpack.c.h.b16 %v266
    %v826 = vunpack.c.l.b16 %v267
    %v827 = vunpack.c.h.b16 %v267
    %v828 = vunpack.c.l.b16 %v268
    %v829 = vunpack.c.h.b16 %v268
    %v830 = vunpack.c.l.b16 %v269
    %v831 = vunpack.c.h.b16 %v269
    %v832 = vunpack.c.l.b16 %v270
    %v833 = vunpack.c.h.b16 %v270
    %v834 = vunpack.c.l.b16 %v271
    %v835 = vunpack.c.h.b16 %v271
    %v836 = vunpack.c.l.b16 %v272
    %v837 = vunpack.c.h.b16 %v272
    %v838 = vunpack.c.l.b16 %v273
    %v839 = vunpack.c.h.b16 %v273
    %v840 = vunpack.c.l.b16 %v274
    %v841 = vunpack.c.h.b16 %v274
    %v842 = vunpack.c.l.b16 %v275
    %v843 = vunpack.c.h.b16 %v275
    %v844 = vunpack.c.l.b16 %v276
    %v845 = vunpack.c.h.b16 %v276
    %v846 = vunpack.c.l.b16 %v277
    %v847 = vunpack.c.h.b16 %v277
    %v848 = vunpack.c.l.b16 %v278
    %v849 = vunpack.c.h.b16 %v278
    %v850 = vunpack.c.l.b16 %v279
    %v851 = vunpack.c.h.b16 %v279
    %v852 = vunpack.c.l.b16 %v280
    %v853 = vunpack.c.h.b16 %v280
    %v854 = vunpack.c.l.b16 %v281
    %v855 = vunpack.c.h.b16 %v281
    %v856 = vunpack.c.l.b16 %v282
    %v857 = vunpack.c.h.b16 %v282
    %v858 = vunpack.c.l.b16 %v283
    %v859 = vunpack.c.h.b16 %v283
    %v860 = vunpack.c.l.b16 %v284
    %v861 = vunpack.c.h.b16 %v284
    %v862 = vunpack.c.l.b16 %v285
    %v863 = vunpack.c.h.b16 %v285
    %v864 = vunpack.c.l.b16 %v286
    %v865 = vunpack.c.h.b16 %v286
    %v866 = vunpack.c.l.b16 %v287
    %v867 = vunpack.c.h.b16 %v287
    %v868 = vunpack.c.l.b16 %v288
    %v869 = vunpack.c.h.b16 %v288
    %v870 = vunpack.c.l.b16 %v289
    %v871 = vunpack.c.h.b16 %v289
    %v872 = vunpack.c.l.b16 %v290
    %v873 = vunpack.c.h.b16 %v290
    %v874 = vunpack.c.l.b16 %v291
    %v875 = vunpack.c.h.b16 %v291
    %v876 = vunpack.c.l.b16 %v292
    %v877 = vunpack.c.h.b16 %v292
    %v878 = vunpack.c.l.b16 %v293
    %v879 = vunpack.c.h.b16 %v293
    %v880 = vunpack.c.l.b16 %v294
    %v881 = vunpack.c.h.b16 %v294
    %v882 = vunpack.c.l.b16 %v295
    %v883 = vunpack.c.h.b16 %v295
    %v884 = vunpack.c.l.b16 %v296
    %v885 = vunpack.c.h.b16 %v296
    %v886 = vunpack.c.l.b16 %v297
    %v887 = vunpack.c.h.b16 %v297
    %v888 = vunpack.c.l.b16 %v298
    %v889 = vunpack.c.h.b16 %v298
    %v890 = vunpack.c.l.b16 %v299
    %v891 = vunpack.c.h.b16 %v299
    %v892 = vunpack.c.l.b16 %v300
    %v893 = vunpack.c.h.b16 %v300
    %v894 = vunpack.c.l.b16 %v301
    %v895 = vunpack.c.h.b16 %v301
    %v896 = vunpack.c.l.b16 %v302
    %v897 = vunpack.c.h.b16 %v302
    %v898 = vunpack.c.l.b16 %v303
    %v899 = vunpack.c.h.b16 %v303
    %v900 = vunpack.c.l.b16 %v304
    %v901 = vunpack.c.h.b16 %v304
    %v902 = vunpack.c.l.b16 %v305
    %v903 = vunpack.c.h.b16 %v305
    %v904 = vunpack.c.l.b16 %v306
    %v905 = vunpack.c.h.b16 %v306
    %v906 = vunpack.c.l.b16 %v307
    %v907 = vunpack.c.h.b16 %v307
    %v908 = vunpack.c.l.b16 %v308
    %v909 = vunpack.c.h.b16 %v308
    %v910 = vunpack.c.l.b16 %v309
    %v911 = vunpack.c.h.b16 %v309
    %v912 = vunpack.c.l.b16 %v310
    %v913 = vunpack.c.h.b16 %v310
    %v914 = vunpack.c.l.b16 %v311
    %v915 = vunpack.c.h.b16 %v311
    %v916 = vunpack.c.l.b16 %v312
    %v917 = vunpack.c.h.b16 %v312
    %v918 = vunpack.c.l.b16 %v313
    %v919 = vunpack.c.h.b16 %v313
    %v920 = vunpack.c.l.b16 %v314
    %v921 = vunpack.c.h.b16 %v314
    %v922 = vunpack.c.l.b16 %v315
    %v923 = vunpack.c.h.b16 %v315
    %v924 = vunpack.c.l.b16 %v316
    %v925 = vunpack.c.h.b16 %v316
    %v926 = vunpack.c.l.b16 %v317
    %v927 = vunpack.c.h.b16 %v317
    %v928 = vunpack.c.l.b16 %v318
    %v929 = vunpack.c.h.b16 %v318
    %v930 = vpack.c.b16 %v532, %v530
    %v931 = vpack.c.b16 %v533, %v531
    %v932 = vpack.c.b16 %v536, %v534
    %v933 = vpack.c.b16 %v537, %v535
    %v934 = vpack.c.b16 %v540, %v538
    %v935 = vpack.c.b16 %v541, %v539
    %v936 = vpack.c.b16 %v544, %v542
    %v937 = vpack.c.b16 %v545, %v543
    %v938 = vpack.c.b16 %v548, %v546
    %v939 = vpack.c.b16 %v549, %v547
    %v940 = vpack.c.b16 %v552, %v550
    %v941 = vpack.c.b16 %v553, %v551
    %v942 = vpack.c.b16 %v556, %v554
    %v943 = vpack.c.b16 %v557, %v555
    %v944 = vpack.c.b16 %v560, %v558
    %v945 = vpack.c.b16 %v561, %v559
    %v946 = vpack.c.b16 %v564, %v562
    %v947 = vpack.c.b16 %v565, %v563
    %v948 = vpack.c.b16 %v568, %v566
    %v949 = vpack.c.b16 %v569, %v567
    %v950 = vpack.c.b16 %v572, %v570
    %v951 = vpack.c.b16 %v573, %v571
    %v952 = vpack.c.b16 %v576, %v574
    %v953 = vpack.c.b16 %v577, %v575
    %v954 = vpack.c.b16 %v580, %v578
    %v955 = vpack.c.b16 %v581, %v579
    %v956 = vpack.c.b16 %v584, %v582
    %v957 = vpack.c.b16 %v585, %v583
    %v958 = vpack.c.b16 %v588, %v586
    %v959 = vpack.c.b16 %v589, %v587
    %v960 = vpack.c.b16 %v592, %v590
    %v961 = vpack.c.b16 %v593, %v591
    %v962 = vpack.c.b16 %v596, %v594
    %v963 = vpack.c.b16 %v597, %v595
    %v964 = vpack.c.b16 %v600, %v598
    %v965 = vpack.c.b16 %v601, %v599
    %v966 = vpack.c.b16 %v604, %v602
    %v967 = vpack.c.b16 %v605, %v603
    %v968 = vpack.c.b16 %v608, %v606
    %v969 = vpack.c.b16 %v609, %v607
    %v970 = vpack.c.b16 %v612, %v610
    %v971 = vpack.c.b16 %v613, %v611
    %v972 = vpack.c.b16 %v616, %v614
    %v973 = vpack.c.b16 %v617, %v615
    %v974 = vpack.c.b16 %v620, %v618
    %v975 = vpack.c.b16 %v621, %v619
    %v976 = vpack.c.b16 %v624, %v622
    %v977 = vpack.c.b16 %v625, %v623
    %v978 = vpack.c.b16 %v628, %v626
    %v979 = vpack.c.b16 %v629, %v627
    %v980 = vpack.c.b16 %v632, %v630
    %v981 = vpack.c.b16 %v633, %v631
    %v982 = vpack.c.b16 %v636, %v634
    %v983 = vpack.c.b16 %v637, %v635
    %v984 = vpack.c.b16 %v640, %v638
    %v985 = vpack.c.b16 %v641, %v639
    %v986 = vpack.c.b16 %v644, %v642
    %v987 = vpack.c.b16 %v645, %v643
    %v988 = vpack.c.b16 %v648, %v646
    %v989 = vpack.c.b16 %v649, %v647
    %v990 = vpack.c.b16 %v652, %v650
    %v991 = vpack.c.b16 %v653, %v651
    %v992 = vpack.c.b16 %v656, %v654
    %v993 = vpack.c.b16 %v657, %v655
    %v994 = vpack.c.b16 %v660, %v658
    %v995 = vpack.c.b16 %v661, %v659
    %v996 = vpack.c.b16 %v664, %v662
    %v997 = vpack.c.b16 %v665, %v663
    %v998 = vpack.c.b16 %v668, %v666
    %v999 = vpack.c.b16 %v669, %v667
    %v1000 = vpack.c.b16 %v672, %v670
    %v1001 = vpack.c.b16 %v673, %v671
    %v1002 = vpack.c.b16 %v676, %v674
    %v1003 = vpack.c.b16 %v677, %v675
    %v1004 = vpack.c.b16 %v680, %v678
    %v1005 = vpack.c.b16 %v681, %v679
    %v1006 = vpack.c.b16 %v684, %v682
    %v1007 = vpack.c.b16 %v685, %v683
    %v1008 = vpack.c.b16 %v688, %v686
    %v1009 = vpack.c.b16 %v689, %v687
    %v1010 = vpack.c.b16 %v692, %v690
    %v1011 = vpack.c.b16 %v693, %v691
    %v1012 = vpack.c.b16 %v696, %v694
    %v1013 = vpack.c.b16 %v697, %v695
    %v1014 = vpack.c.b16 %v700, %v698
    %v1015 = vpack.c.b16 %v701, %v699
    %v1016 = vpack.c.b16 %v704, %v702
    %v1017 = vpack.c.b16 %v705, %v703
    %v1018 = vpack.c.b16 %v708, %v706
    %v1019 = vpack.c.b16 %v709, %v707
    %v1020 = vpack.c.b16 %v712, %v710
    %v1021 = vpack.c.b16 %v713, %v711
    %v1022 = vpack.c.b16 %v716, %v714
    %v1023 = vpack.c.b16 %v717, %v715
    %v1024 = vpack.c.b16 %v720, %v718
    %v1025 = vpack.c.b16 %v721, %v719
    %v1026 = vpack.c.b16 %v724, %v722
    %v1027 = vpack.c.b16 %v725, %v723
    %v1028 = vpack.c.b16 %v728, %v726
    %v1029 = vpack.c.b16 %v729, %v727
    %v1030 = vpack.c.b16 %v732, %v730
    %v1031 = vpack.c.b16 %v733, %v731
    %v1032 = vpack.c.b16 %v736, %v734
    %v1033 = vpack.c.b16 %v737, %v735
    %v1034 = vpack.c.b16 %v740, %v738
    %v1035 = vpack.c.b16 %v741, %v739
    %v1036 = vpack.c.b16 %v744, %v742
    %v1037 = vpack.c.b16 %v745, %v743
    %v1038 = vpack.c.b16 %v748, %v746
    %v1039 = vpack.c.b16 %v749, %v747
    %v1040 = vpack.c.b16 %v752, %v750
    %v1041 = vpack.c.b16 %v753, %v751
    %v1042 = vpack.c.b16 %v756, %v754
    %v1043 = vpack.c.b16 %v757, %v755
    %v1044 = vpack.c.b16 %v760, %v758
    %v1045 = vpack.c.b16 %v761, %v759
    %v1046 = vpack.c.b16 %v764, %v762
    %v1047 = vpack.c.b16 %v765, %v763
    %v1048 = vpack.c.b16 %v768, %v766
    %v1049 = vpack.c.b16 %v769, %v767
    %v1050 = vpack.c.b16 %v772, %v770
    %v1051 = vpack.c.b16 %v773, %v771
    %v1052 = vpack.c.b16 %v776, %v774
    %v1053 = vpack.c.b16 %v777, %v775
    %v1054 = vpack.c.b16 %v780, %v778
    %v1055 = vpack.c.b16 %v781, %v779
    %v1056 = vpack.c.b16 %v784, %v782
    %v1057 = vpack.c.b16 %v785, %v783
    %v1058 = vpack.c.b16 %v788, %v786
    %v1059 = vpack.c.b16 %v789, %v787
    %v1060 = vpack.c.b16 %v792, %v790
    %v1061 = vpack.c.b16 %v793, %v791
    %v1062 = vpack.c.b16 %v796, %v794
    %v1063 = vpack.c.b16 %v797, %v795
    %v1064 = vpack.c.b16 %v800, %v798
    %v1065 = vpack.c.b16 %v801, %v799
    %v1066 = vpack.c.b16 %v804, %v802
    %v1067 = vpack.c.b16 %v805, %v803
    %v1068 = vpack.c.b16 %v808, %v806
    %v1069 = vpack.c.b16 %v809, %v807
    %v1070 = vpack.c.b16 %v812, %v810
    %v1071 = vpack.c.b16 %v813, %v811
    %v1072 = vpack.c.b16 %v816, %v814
    %v1073 = vpack.c.b16 %v817, %v815
    %v1074 = vpack.c.b16 %v820, %v818
    %v1075 = vpack.c.b16 %v821, %v819
    %v1076 = vpack.c.b16 %v824, %v822
    %v1077 = vpack.c.b16 %v825, %v823
    %v1078 = vpack.c.b16 %v828, %v826
    %v1079 = vpack.c.b16 %v829, %v827
    %v1080 = vpack.c.b16 %v832, %v830
    %v1081 = vpack.c.b16 %v833, %v831
    %v1082 = vpack.c.b16 %v836, %v834
    %v1083 = vpack.c.b16 %v837, %v835
    %v1084 = vpack.c.b16 %v840, %v838
    %v1085 = vpack.c.b16 %v841, %v839
    %v1086 = vpack.c.b16 %v844, %v842
    %v1087 = vpack.c.b16 %v845, %v843
    %v1088 = vpack.c.b16 %v848, %v846
    %v1089 = vpack.c.b16 %v849, %v847
    %v1090 = vpack.c.b16 %v852, %v850
    %v1091 = vpack.c.b16 %v853, %v851
    %v1092 = vpack.c.b16 %v856, %v854
    %v1093 = vpack.c.b16 %v857, %v855
    %v1094 = vpack.c.b16 %v860, %v858
    %v1095 = vpack.c.b16 %v861, %v859
    %v1096 = vpack.c.b16 %v864, %v862
    %v1097 = vpack.c.b16 %v865, %v863
    %v1098 = vpack.c.b16 %v868, %v866
    %v1099 = vpack.c.b16 %v869, %v867
    %v1100 = vpack.c.b16 %v872, %v870
    %v1101 = vpack.c.b16 %v873, %v871
    %v1102 = vpack.c.b16 %v876, %v874
    %v1103 = vpack.c.b16 %v877, %v875
    %v1104 = vpack.c.b16 %v880, %v878
    %v1105 = vpack.c.b16 %v881, %v879
    %v1106 = vpack.c.b16 %v884, %v882
    %v1107 = vpack.c.b16 %v885, %v883
    %v1108 = vpack.c.b16 %v888, %v886
    %v1109 = vpack.c.b16 %v889, %v887
    %v1110 = vpack.c.b16 %v892, %v890
    %v1111 = vpack.c.b16 %v893, %v891
    %v1112 = vpack.c.b16 %v896, %v894
    %v1113 = vpack.c.b16 %v897, %v895
    %v1114 = vpack.c.b16 %v900, %v898
    %v1115 = vpack.c.b16 %v901, %v899
    %v1116 = vpack.c.b16 %v904, %v902
    %v1117 = vpack.c.b16 %v905, %v903
    %v1118 = vpack.c.b16 %v908, %v906
    %v1119 = vpack.c.b16 %v909, %v907
    %v1120 = vpack.c.b16 %v912, %v910
    %v1121 = vpack.c.b16 %v913, %v911
    %v1122 = vpack.c.b16 %v916, %v914
    %v1123 = vpack.c.b16 %v917, %v915
    %v1124 = vpack.c.b16 %v920, %v918
    %v1125 = vpack.c.b16 %v921, %v919
    %v1126 = vpack.c.b16 %v924, %v922
    %v1127 = vpack.c.b16 %v925, %v923
    %v1128 = vpack.c.b16 %v928, %v926
    %v1129 = vpack.c.b16 %v929, %v927
    %vm1330 = vcmask 523264
    %v1332 = vsel %vm1330, %v118, 0
    %1334 = vmatprep.subr.bf16.mxu0 %v945
    %1335 = vmatpush1.bf16.msra.mxu0 %v944
    %1336 = vmatprep.subr.bf16.mxu0 %v943
    %1337 = vmatpush1.bf16.msra.mxu0 %v942
    %1338 = vmatprep.subr.bf16.mxu0 %v941
    %1339 = vmatpush1.bf16.msra.mxu0 %v940
    %1340 = vmatprep.subr.bf16.mxu0 %v939
    %1341 = vmatpush1.bf16.msra.mxu0 %v938
    %1342 = vmatprep.subr.bf16.mxu0 %v937
    %1343 = vmatpush1.bf16.msra.mxu0 %v936
    %1344 = vmatprep.subr.bf16.mxu0 %v935
    %1345 = vmatpush1.bf16.msra.mxu0 %v934
    %1346 = vmatprep.subr.bf16.mxu0 %v933
    %1347 = vmatpush1.bf16.msra.mxu0 %v932
    %1348 = vmatprep.subr.bf16.mxu0 %v931
    %1349 = vmatpush1.bf16.msra.mxu0 %v930
    %1350 = vmatprep.subr.bf16.mxu0 %v961
    %1351 = vmatpush2.bf16.msra.mxu0 %v960
    %1352 = vmatprep.subr.bf16.mxu0 %v959
    %1353 = vmatpush2.bf16.msra.mxu0 %v958
    %1354 = vmatprep.subr.bf16.mxu0 %v957
    %1355 = vmatpush2.bf16.msra.mxu0 %v956
    %1356 = vmatprep.subr.bf16.mxu0 %v955
    %1357 = vmatpush2.bf16.msra.mxu0 %v954
    %1358 = vmatprep.subr.bf16.mxu0 %v953
    %1359 = vmatpush2.bf16.msra.mxu0 %v952
    %1360 = vmatprep.subr.bf16.mxu0 %v951
    %1361 = vmatpush2.bf16.msra.mxu0 %v950
    %1362 = vmatprep.subr.bf16.mxu0 %v949
    %1363 = vmatpush2.bf16.msra.mxu0 %v948
    %1364 = vmatprep.subr.bf16.mxu0 %v947
    %1365 = vmatpush2.bf16.msra.mxu0 %v946
    %1366 = vmatprep.mubr.bf16.mxu0 %v107
    %1367 = vmatmul.mubr.bf16.gmra.mxu0 %v106
    %v1368 = vpop.f32.mrf.mxu0
    %v1369 = vadd.f32 %v325, %v1368
    %v1370 = vpop.f32.mrf.mxu0
    %v1371 = vadd.f32 %v329, %v1370
    %v1372 = vpop.f32.mrf.mxu0
    %v1373 = vpop.f32.mrf.mxu0
    %1374 = vdwg.mxu0
    %1375 = vmatprep.subr.bf16.mxu0 %v977
    %1376 = vmatpush1.bf16.msra.mxu0 %v976
    %1377 = vmatprep.subr.bf16.mxu0 %v975
    %1378 = vmatpush1.bf16.msra.mxu0 %v974
    %1379 = vmatprep.subr.bf16.mxu0 %v973
    %1380 = vmatpush1.bf16.msra.mxu0 %v972
    %1381 = vmatprep.subr.bf16.mxu0 %v971
    %1382 = vmatpush1.bf16.msra.mxu0 %v970
    %1383 = vmatprep.subr.bf16.mxu0 %v969
    %1384 = vmatpush1.bf16.msra.mxu0 %v968
    %1385 = vmatprep.subr.bf16.mxu0 %v967
    %1386 = vmatpush1.bf16.msra.mxu0 %v966
    %1387 = vmatprep.subr.bf16.mxu0 %v965
    %1388 = vmatpush1.bf16.msra.mxu0 %v964
    %1389 = vmatprep.subr.bf16.mxu0 %v963
    %1390 = vmatpush1.bf16.msra.mxu0 %v962
    %1391 = vmatprep.subr.bf16.mxu0 %v993
    %1392 = vmatpush2.bf16.msra.mxu0 %v992
    %1393 = vmatprep.subr.bf16.mxu0 %v991
    %1394 = vmatpush2.bf16.msra.mxu0 %v990
    %1395 = vmatprep.subr.bf16.mxu0 %v989
    %1396 = vmatpush2.bf16.msra.mxu0 %v988
    %1397 = vmatprep.subr.bf16.mxu0 %v987
    %1398 = vmatpush2.bf16.msra.mxu0 %v986
    %1399 = vmatprep.subr.bf16.mxu0 %v985
    %1400 = vmatpush2.bf16.msra.mxu0 %v984
    %1401 = vmatprep.subr.bf16.mxu0 %v983
    %1402 = vmatpush2.bf16.msra.mxu0 %v982
    %1403 = vmatprep.subr.bf16.mxu0 %v981
    %1404 = vmatpush2.bf16.msra.mxu0 %v980
    %1405 = vmatprep.subr.bf16.mxu0 %v979
    %1406 = vmatpush2.bf16.msra.mxu0 %v978
    %1407 = vmatprep.mubr.bf16.mxu0 %v109
    %1408 = vmatmul.mubr.bf16.gmra.mxu0 %v108
    %v1409 = vpop.f32.mrf.mxu0
    %v1410 = vadd.f32 %v1369, %v1409
    %v1411 = vpop.f32.mrf.mxu0
    %v1412 = vadd.f32 %v1371, %v1411
    %v1413 = vpop.f32.mrf.mxu0
    %v1414 = vpop.f32.mrf.mxu0
    %1415 = vdwg.mxu0
    %1416 = vmatprep.subr.bf16.mxu0 %v1009
    %1417 = vmatpush1.bf16.msra.mxu0 %v1008
    %1418 = vmatprep.subr.bf16.mxu0 %v1007
    %1419 = vmatpush1.bf16.msra.mxu0 %v1006
    %1420 = vmatprep.subr.bf16.mxu0 %v1005
    %1421 = vmatpush1.bf16.msra.mxu0 %v1004
    %1422 = vmatprep.subr.bf16.mxu0 %v1003
    %1423 = vmatpush1.bf16.msra.mxu0 %v1002
    %1424 = vmatprep.subr.bf16.mxu0 %v1001
    %1425 = vmatpush1.bf16.msra.mxu0 %v1000
    %1426 = vmatprep.subr.bf16.mxu0 %v999
    %1427 = vmatpush1.bf16.msra.mxu0 %v998
    %1428 = vmatprep.subr.bf16.mxu0 %v997
    %1429 = vmatpush1.bf16.msra.mxu0 %v996
    %1430 = vmatprep.subr.bf16.mxu0 %v995
    %1431 = vmatpush1.bf16.msra.mxu0 %v994
    %1432 = vmatprep.subr.bf16.mxu0 %v1025
    %1433 = vmatpush2.bf16.msra.mxu0 %v1024
    %1434 = vmatprep.subr.bf16.mxu0 %v1023
    %1435 = vmatpush2.bf16.msra.mxu0 %v1022
    %1436 = vmatprep.subr.bf16.mxu0 %v1021
    %1437 = vmatpush2.bf16.msra.mxu0 %v1020
    %1438 = vmatprep.subr.bf16.mxu0 %v1019
    %1439 = vmatpush2.bf16.msra.mxu0 %v1018
    %1440 = vmatprep.subr.bf16.mxu0 %v1017
    %1441 = vmatpush2.bf16.msra.mxu0 %v1016
    %1442 = vmatprep.subr.bf16.mxu0 %v1015
    %1443 = vmatpush2.bf16.msra.mxu0 %v1014
    %1444 = vmatprep.subr.bf16.mxu0 %v1013
    %1445 = vmatpush2.bf16.msra.mxu0 %v1012
    %1446 = vmatprep.subr.bf16.mxu0 %v1011
    %1447 = vmatpush2.bf16.msra.mxu0 %v1010
    %1448 = vmatprep.mubr.bf16.mxu0 %v111
    %1449 = vmatmul.mubr.bf16.gmra.mxu0 %v110
    %v1450 = vpop.f32.mrf.mxu0
    %v1451 = vadd.f32 %v1410, %v1450
    %v1452 = vpop.f32.mrf.mxu0
    %v1453 = vadd.f32 %v1412, %v1452
    %v1454 = vpop.f32.mrf.mxu0
    %v1455 = vpop.f32.mrf.mxu0
    %1456 = vdwg.mxu0
    %1457 = vmatprep.subr.bf16.mxu0 %v1041
    %1458 = vmatpush1.bf16.msra.mxu0 %v1040
    %1459 = vmatprep.subr.bf16.mxu0 %v1039
    %1460 = vmatpush1.bf16.msra.mxu0 %v1038
    %1461 = vmatprep.subr.bf16.mxu0 %v1037
    %1462 = vmatpush1.bf16.msra.mxu0 %v1036
    %1463 = vmatprep.subr.bf16.mxu0 %v1035
    %1464 = vmatpush1.bf16.msra.mxu0 %v1034
    %1465 = vmatprep.subr.bf16.mxu0 %v1033
    %1466 = vmatpush1.bf16.msra.mxu0 %v1032
    %1467 = vmatprep.subr.bf16.mxu0 %v1031
    %1468 = vmatpush1.bf16.msra.mxu0 %v1030
    %1469 = vmatprep.subr.bf16.mxu0 %v1029
    %1470 = vmatpush1.bf16.msra.mxu0 %v1028
    %1471 = vmatprep.subr.bf16.mxu0 %v1027
    %1472 = vmatpush1.bf16.msra.mxu0 %v1026
    %1473 = vmatprep.subr.bf16.mxu0 %v1057
    %1474 = vmatpush2.bf16.msra.mxu0 %v1056
    %1475 = vmatprep.subr.bf16.mxu0 %v1055
    %1476 = vmatpush2.bf16.msra.mxu0 %v1054
    %1477 = vmatprep.subr.bf16.mxu0 %v1053
    %1478 = vmatpush2.bf16.msra.mxu0 %v1052
    %1479 = vmatprep.subr.bf16.mxu0 %v1051
    %1480 = vmatpush2.bf16.msra.mxu0 %v1050
    %1481 = vmatprep.subr.bf16.mxu0 %v1049
    %1482 = vmatpush2.bf16.msra.mxu0 %v1048
    %1483 = vmatprep.subr.bf16.mxu0 %v1047
    %1484 = vmatpush2.bf16.msra.mxu0 %v1046
    %1485 = vmatprep.subr.bf16.mxu0 %v1045
    %1486 = vmatpush2.bf16.msra.mxu0 %v1044
    %1487 = vmatprep.subr.bf16.mxu0 %v1043
    %1488 = vmatpush2.bf16.msra.mxu0 %v1042
    %1489 = vmatprep.mubr.bf16.mxu0 %v113
    %1490 = vmatmul.mubr.bf16.gmra.mxu0 %v112
    %v1491 = vpop.f32.mrf.mxu0
    %v1492 = vadd.f32 %v1451, %v1491
    %v1493 = vpop.f32.mrf.mxu0
    %v1494 = vadd.f32 %v1453, %v1493
    %v1495 = vpop.f32.mrf.mxu0
    %v1496 = vpop.f32.mrf.mxu0
    %1497 = vdwg.mxu0
    %1498 = vmatprep.subr.bf16.mxu0 %v1073
    %1499 = vmatpush1.bf16.msra.mxu0 %v1072
    %1500 = vmatprep.subr.bf16.mxu0 %v1071
    %1501 = vmatpush1.bf16.msra.mxu0 %v1070
    %1502 = vmatprep.subr.bf16.mxu0 %v1069
    %1503 = vmatpush1.bf16.msra.mxu0 %v1068
    %1504 = vmatprep.subr.bf16.mxu0 %v1067
    %1505 = vmatpush1.bf16.msra.mxu0 %v1066
    %1506 = vmatprep.subr.bf16.mxu0 %v1065
    %1507 = vmatpush1.bf16.msra.mxu0 %v1064
    %1508 = vmatprep.subr.bf16.mxu0 %v1063
    %1509 = vmatpush1.bf16.msra.mxu0 %v1062
    %1510 = vmatprep.subr.bf16.mxu0 %v1061
    %1511 = vmatpush1.bf16.msra.mxu0 %v1060
    %1512 = vmatprep.subr.bf16.mxu0 %v1059
    %1513 = vmatpush1.bf16.msra.mxu0 %v1058
    %1514 = vmatprep.subr.bf16.mxu0 %v1089
    %1515 = vmatpush2.bf16.msra.mxu0 %v1088
    %1516 = vmatprep.subr.bf16.mxu0 %v1087
    %1517 = vmatpush2.bf16.msra.mxu0 %v1086
    %1518 = vmatprep.subr.bf16.mxu0 %v1085
    %1519 = vmatpush2.bf16.msra.mxu0 %v1084
    %1520 = vmatprep.subr.bf16.mxu0 %v1083
    %1521 = vmatpush2.bf16.msra.mxu0 %v1082
    %1522 = vmatprep.subr.bf16.mxu0 %v1081
    %1523 = vmatpush2.bf16.msra.mxu0 %v1080
    %1524 = vmatprep.subr.bf16.mxu0 %v1079
    %1525 = vmatpush2.bf16.msra.mxu0 %v1078
    %1526 = vmatprep.subr.bf16.mxu0 %v1077
    %1527 = vmatpush2.bf16.msra.mxu0 %v1076
    %1528 = vmatprep.subr.bf16.mxu0 %v1075
    %1529 = vmatpush2.bf16.msra.mxu0 %v1074
    %1530 = vmatprep.mubr.bf16.mxu0 %v115
    %1531 = vmatmul.mubr.bf16.gmra.mxu0 %v114
    %v1532 = vpop.f32.mrf.mxu0
    %v1533 = vadd.f32 %v1492, %v1532
    %v1534 = vpop.f32.mrf.mxu0
    %v1535 = vadd.f32 %v1494, %v1534
    %v1536 = vpop.f32.mrf.mxu0
    %v1537 = vpop.f32.mrf.mxu0
    %1538 = vdwg.mxu0
    %1539 = vmatprep.subr.bf16.mxu0 %v1105
    %1540 = vmatpush1.bf16.msra.mxu0 %v1104
    %1541 = vmatprep.subr.bf16.mxu0 %v1103
    %1542 = vmatpush1.bf16.msra.mxu0 %v1102
    %1543 = vmatprep.subr.bf16.mxu0 %v1101
    %1544 = vmatpush1.bf16.msra.mxu0 %v1100
    %1545 = vmatprep.subr.bf16.mxu0 %v1099
    %1546 = vmatpush1.bf16.msra.mxu0 %v1098
    %1547 = vmatprep.subr.bf16.mxu0 %v1097
    %1548 = vmatpush1.bf16.msra.mxu0 %v1096
    %1549 = vmatprep.subr.bf16.mxu0 %v1095
    %1550 = vmatpush1.bf16.msra.mxu0 %v1094
    %1551 = vmatprep.subr.bf16.mxu0 %v1093
    %1552 = vmatpush1.bf16.msra.mxu0 %v1092
    %1553 = vmatprep.subr.bf16.mxu0 %v1091
    %1554 = vmatpush1.bf16.msra.mxu0 %v1090
    %1555 = vmatprep.subr.bf16.mxu0 %v1121
    %1556 = vmatpush2.bf16.msra.mxu0 %v1120
    %1557 = vmatprep.subr.bf16.mxu0 %v1119
    %1558 = vmatpush2.bf16.msra.mxu0 %v1118
    %1559 = vmatprep.subr.bf16.mxu0 %v1117
    %1560 = vmatpush2.bf16.msra.mxu0 %v1116
    %1561 = vmatprep.subr.bf16.mxu0 %v1115
    %1562 = vmatpush2.bf16.msra.mxu0 %v1114
    %1563 = vmatprep.subr.bf16.mxu0 %v1113
    %1564 = vmatpush2.bf16.msra.mxu0 %v1112
    %1565 = vmatprep.subr.bf16.mxu0 %v1111
    %1566 = vmatpush2.bf16.msra.mxu0 %v1110
    %1567 = vmatprep.subr.bf16.mxu0 %v1109
    %1568 = vmatpush2.bf16.msra.mxu0 %v1108
    %1569 = vmatprep.subr.bf16.mxu0 %v1107
    %1570 = vmatpush2.bf16.msra.mxu0 %v1106
    %1571 = vmatprep.mubr.bf16.mxu0 %v117
    %1572 = vmatmul.mubr.bf16.gmra.mxu0 %v116
    %v1573 = vpop.f32.mrf.mxu0
    %v1574 = vadd.f32 %v1533, %v1573
    %v1575 = vpop.f32.mrf.mxu0
    %v1576 = vadd.f32 %v1535, %v1575
    %v1577 = vpop.f32.mrf.mxu0
    %v1578 = vpop.f32.mrf.mxu0
    %1579 = vdwg.mxu0
    %1580 = vmatprep.subr.bf16.mxu0 0
    %1581 = vmatpush1.bf16.msra.mxu0 0
    %1582 = vmatprep.subr.bf16.mxu0 0
    %1583 = vmatpush1.bf16.msra.mxu0 0
    %1584 = vmatprep.subr.bf16.mxu0 0
    %1585 = vmatpush1.bf16.msra.mxu0 0
    %1586 = vmatprep.subr.bf16.mxu0 0
    %1587 = vmatpush1.bf16.msra.mxu0 0
    %1588 = vmatprep.subr.bf16.mxu0 %v1129
    %1589 = vmatpush1.bf16.msra.mxu0 %v1128
    %1590 = vmatprep.subr.bf16.mxu0 %v1127
    %1591 = vmatpush1.bf16.msra.mxu0 %v1126
    %1592 = vmatprep.subr.bf16.mxu0 %v1125
    %1593 = vmatpush1.bf16.msra.mxu0 %v1124
    %1594 = vmatprep.subr.bf16.mxu0 %v1123
    %1595 = vmatpush1.bf16.msra.mxu0 %v1122
    %1596 = vmatprep.subr.bf16.mxu0 0
    %1597 = vmatpush2.bf16.msra.mxu0 0
    %1598 = vmatprep.subr.bf16.mxu0 0
    %1599 = vmatpush2.bf16.msra.mxu0 0
    %1600 = vmatprep.subr.bf16.mxu0 0
    %1601 = vmatpush2.bf16.msra.mxu0 0
    %1602 = vmatprep.subr.bf16.mxu0 0
    %1603 = vmatpush2.bf16.msra.mxu0 0
    %1604 = vmatprep.subr.bf16.mxu0 0
    %1605 = vmatpush2.bf16.msra.mxu0 0
    %1606 = vmatprep.subr.bf16.mxu0 0
    %1607 = vmatpush2.bf16.msra.mxu0 0
    %1608 = vmatprep.subr.bf16.mxu0 0
    %1609 = vmatpush2.bf16.msra.mxu0 0
    %1610 = vmatprep.subr.bf16.mxu0 0
    %1611 = vmatpush2.bf16.msra.mxu0 0
    %1612 = vmatprep.mubr.bf16.mxu0 0
    %1613 = vmatmul.mubr.bf16.gmra.mxu0 %v1332
    %v1614 = vpop.f32.mrf.mxu0
    %v1615 = vadd.f32 %v1574, %v1614
    %v1616 = vpop.f32.mrf.mxu0
    %v1617 = vadd.f32 %v1576, %v1616
    %v1618 = vpop.f32.mrf.mxu0
    %v1619 = vpop.f32.mrf.mxu0
    %1620 = vdwg.mxu0
    %v1621 = vmax.f32 %v1615, 0.0
    %v1622 = vmax.f32 %v1617, 0.0
    %v1623 = vpack.c.bf16 %v1621, %v1621
    %v1624 = vpack.c.bf16 %v1622, %v1622
    %v1625 = vld [vmem:[#allocation2 + $0x650] sm:$0xff]
    %v1626 = vld [vmem:[#allocation2 + $0x658] sm:$0xff]
    %v1627 = vld [vmem:[#allocation2 + $0x660] sm:$0xff]
    %v1628 = vld [vmem:[#allocation2 + $0x668] sm:$0xff]
    %v1629 = vld [vmem:[#allocation2 + $0x670] sm:$0xff]
    %v1630 = vld [vmem:[#allocation2 + $0x678] sm:$0xff]
    %v1631 = vld [vmem:[#allocation2 + $0x680] sm:$0xff]
    %v1632 = vld [vmem:[#allocation2 + $0x688] sm:$0xff]
    %v1633 = vld [vmem:[#allocation2 + $0x690] sm:$0xff]
    %v1634 = vld [vmem:[#allocation2 + $0x698] sm:$0xff]
    %v1635 = vld [vmem:[#allocation2 + $0x6a0] sm:$0xff]
    %v1636 = vld [vmem:[#allocation2 + $0x6a8] sm:$0xff]
    %v1637 = vld [vmem:[#allocation2 + $0x6b0] sm:$0xff]
    %v1638 = vld [vmem:[#allocation2 + $0x6b8] sm:$0xff]
    %v1639 = vld [vmem:[#allocation2 + $0x6c0] sm:$0xff]
    %v1640 = vld [vmem:[#allocation2 + $0x6c8] sm:$0xff]
    %v1641 = vld [vmem:[#allocation2 + $0x6d0] sm:$0xff]
    %v1642 = vld [vmem:[#allocation2 + $0x6d8] sm:$0xff]
    %v1643 = vld [vmem:[#allocation2 + $0x6e0] sm:$0xff]
    %v1644 = vld [vmem:[#allocation2 + $0x6e8] sm:$0xff]
    %v1645 = vld [vmem:[#allocation2 + $0x6f0] sm:$0xff]
    %v1646 = vld [vmem:[#allocation2 + $0x6f8] sm:$0xff]
    %v1647 = vld [vmem:[#allocation2 + $0x700] sm:$0xff]
    %v1648 = vld [vmem:[#allocation2 + $0x708] sm:$0xff]
    %v1649 = vld [vmem:[#allocation2 + $0x710] sm:$0xff]
    %v1650 = vld [vmem:[#allocation2 + $0x720] sm:$0x11]
    %v1651 = vunpack.c.l.bf16 %v1650
    %v1652 = vlaneseq
    %v1653 = vshrl.u32 %v1652, 7
    %v1654 = vsub.s32 0, %v1653
    %v1655 = vrot.slane %v1651, %v1654
    %v1681 = vunpack.c.l.b16 %v1625
    %v1682 = vunpack.c.h.b16 %v1625
    %v1683 = vunpack.c.l.b16 %v1626
    %v1684 = vunpack.c.h.b16 %v1626
    %v1685 = vunpack.c.l.b16 %v1627
    %v1686 = vunpack.c.h.b16 %v1627
    %v1687 = vunpack.c.l.b16 %v1628
    %v1688 = vunpack.c.h.b16 %v1628
    %v1689 = vunpack.c.l.b16 %v1629
    %v1690 = vunpack.c.h.b16 %v1629
    %v1691 = vunpack.c.l.b16 %v1630
    %v1692 = vunpack.c.h.b16 %v1630
    %v1693 = vunpack.c.l.b16 %v1631
    %v1694 = vunpack.c.h.b16 %v1631
    %v1695 = vunpack.c.l.b16 %v1632
    %v1696 = vunpack.c.h.b16 %v1632
    %v1697 = vunpack.c.l.b16 %v1633
    %v1698 = vunpack.c.h.b16 %v1633
    %v1699 = vunpack.c.l.b16 %v1634
    %v1700 = vunpack.c.h.b16 %v1634
    %v1701 = vunpack.c.l.b16 %v1635
    %v1702 = vunpack.c.h.b16 %v1635
    %v1703 = vunpack.c.l.b16 %v1636
    %v1704 = vunpack.c.h.b16 %v1636
    %v1705 = vunpack.c.l.b16 %v1637
    %v1706 = vunpack.c.h.b16 %v1637
    %v1707 = vunpack.c.l.b16 %v1638
    %v1708 = vunpack.c.h.b16 %v1638
    %v1709 = vunpack.c.l.b16 %v1639
    %v1710 = vunpack.c.h.b16 %v1639
    %v1711 = vunpack.c.l.b16 %v1640
    %v1712 = vunpack.c.h.b16 %v1640
    %v1713 = vunpack.c.l.b16 %v1641
    %v1714 = vunpack.c.h.b16 %v1641
    %v1715 = vunpack.c.l.b16 %v1642
    %v1716 = vunpack.c.h.b16 %v1642
    %v1717 = vunpack.c.l.b16 %v1643
    %v1718 = vunpack.c.h.b16 %v1643
    %v1719 = vunpack.c.l.b16 %v1644
    %v1720 = vunpack.c.h.b16 %v1644
    %v1721 = vunpack.c.l.b16 %v1645
    %v1722 = vunpack.c.h.b16 %v1645
    %v1723 = vunpack.c.l.b16 %v1646
    %v1724 = vunpack.c.h.b16 %v1646
    %v1725 = vunpack.c.l.b16 %v1647
    %v1726 = vunpack.c.h.b16 %v1647
    %v1727 = vunpack.c.l.b16 %v1648
    %v1728 = vunpack.c.h.b16 %v1648
    %v1729 = vunpack.c.l.b16 %v1649
    %v1730 = vunpack.c.h.b16 %v1649
    %v1731 = vpack.c.b16 %v1683, %v1681
    %v1732 = vpack.c.b16 %v1684, %v1682
    %v1733 = vpack.c.b16 %v1687, %v1685
    %v1734 = vpack.c.b16 %v1688, %v1686
    %v1735 = vpack.c.b16 %v1691, %v1689
    %v1736 = vpack.c.b16 %v1692, %v1690
    %v1737 = vpack.c.b16 %v1695, %v1693
    %v1738 = vpack.c.b16 %v1696, %v1694
    %v1739 = vpack.c.b16 %v1699, %v1697
    %v1740 = vpack.c.b16 %v1700, %v1698
    %v1741 = vpack.c.b16 %v1703, %v1701
    %v1742 = vpack.c.b16 %v1704, %v1702
    %v1743 = vpack.c.b16 %v1707, %v1705
    %v1744 = vpack.c.b16 %v1708, %v1706
    %v1745 = vpack.c.b16 %v1711, %v1709
    %v1746 = vpack.c.b16 %v1712, %v1710
    %v1747 = vpack.c.b16 %v1715, %v1713
    %v1748 = vpack.c.b16 %v1716, %v1714
    %v1749 = vpack.c.b16 %v1719, %v1717
    %v1750 = vpack.c.b16 %v1720, %v1718
    %v1751 = vpack.c.b16 %v1723, %v1721
    %v1752 = vpack.c.b16 %v1724, %v1722
    %v1753 = vpack.c.b16 %v1727, %v1725
    %v1754 = vpack.c.b16 %v1728, %v1726
    %v1755 = vpack.c.b16 %v1729, %v1729
    %v1756 = vpack.c.b16 %v1730, %v1730
    %vm1781 = vcmask 588800
    %v1783 = vsel %vm1781, %v1624, 0
    %vm1785 = vcmask 1043456
    %v1787 = vsel %vm1785, %v1755, 0
    %v1790 = vsel %vm1785, %v1756, 0
    %1792 = vmatprep.subr.bf16.mxu0 %v1746
    %1793 = vmatpush1.bf16.msra.mxu0 %v1745
    %1794 = vmatprep.subr.bf16.mxu0 %v1744
    %1795 = vmatpush1.bf16.msra.mxu0 %v1743
    %1796 = vmatprep.subr.bf16.mxu0 %v1742
    %1797 = vmatpush1.bf16.msra.mxu0 %v1741
    %1798 = vmatprep.subr.bf16.mxu0 %v1740
    %1799 = vmatpush1.bf16.msra.mxu0 %v1739
    %1800 = vmatprep.subr.bf16.mxu0 %v1738
    %1801 = vmatpush1.bf16.msra.mxu0 %v1737
    %1802 = vmatprep.subr.bf16.mxu0 %v1736
    %1803 = vmatpush1.bf16.msra.mxu0 %v1735
    %1804 = vmatprep.subr.bf16.mxu0 %v1734
    %1805 = vmatpush1.bf16.msra.mxu0 %v1733
    %1806 = vmatprep.subr.bf16.mxu0 %v1732
    %1807 = vmatpush1.bf16.msra.mxu0 %v1731
    %1808 = vmatprep.subr.bf16.mxu0 0
    %1809 = vmatpush2.bf16.msra.mxu0 0
    %1810 = vmatprep.subr.bf16.mxu0 0
    %1811 = vmatpush2.bf16.msra.mxu0 0
    %1812 = vmatprep.subr.bf16.mxu0 0
    %1813 = vmatpush2.bf16.msra.mxu0 0
    %1814 = vmatprep.subr.bf16.mxu0 %v1790
    %1815 = vmatpush2.bf16.msra.mxu0 %v1787
    %1816 = vmatprep.subr.bf16.mxu0 %v1754
    %1817 = vmatpush2.bf16.msra.mxu0 %v1753
    %1818 = vmatprep.subr.bf16.mxu0 %v1752
    %1819 = vmatpush2.bf16.msra.mxu0 %v1751
    %1820 = vmatprep.subr.bf16.mxu0 %v1750
    %1821 = vmatpush2.bf16.msra.mxu0 %v1749
    %1822 = vmatprep.subr.bf16.mxu0 %v1748
    %1823 = vmatpush2.bf16.msra.mxu0 %v1747
    %1824 = vmatprep.mubr.bf16.mxu0 %v1783
    %1825 = vmatmul.mubr.bf16.gmra.mxu0 %v1623
    %v1826 = vpop.f32.mrf.mxu0
    %v1827 = vadd.f32 %v1655, %v1826
    %v1828 = vpop.f32.mrf.mxu0
    %v1829 = vpop.f32.mrf.mxu0
    %v1830 = vpop.f32.mrf.mxu0
    %1831 = vdwg.mxu0
    %v1832 = vmax.f32 %v1827, 0.0
    %v1833 = vpack.c.bf16 %v1832, %v1832
    %v1834 = vld [vmem:[#allocation2 + $0x730] sm:$0xff]
    %v1835 = vld [vmem:[#allocation2 + $0x738] sm:$0xff]
    %v1836 = vld [vmem:[#allocation2 + $0x740] sm:$0xff]
    %v1837 = vld [vmem:[#allocation2 + $0x748] sm:$0xff]
    %v1838 = vld [vmem:[#allocation2 + $0x750] sm:$0xff]
    %v1839 = vld [vmem:[#allocation2 + $0x758] sm:$0xff]
    %v1840 = vld [vmem:[#allocation2 + $0x760] sm:$0xff]
    %v1841 = vld [vmem:[#allocation2 + $0x768] sm:$0xff]
    %v1842 = vld [vmem:[#allocation2 + $0x770] sm:$0xff]
    %v1843 = vld [vmem:[#allocation2 + $0x778] sm:$0xff]
    %v1844 = vld [vmem:[#allocation2 + $0x780] sm:$0xff]
    %v1845 = vld [vmem:[#allocation2 + $0x788] sm:$0xff]
    %v1846 = vld [vmem:[#allocation2 + $0x790] sm:$0x33]
    %v1847 = vld [vmem:[#allocation2 + $0x7a0] sm:$0x11]
    %v1848 = vunpack.c.l.bf16 %v1847
    %v1849 = vunpack.c.h.bf16 %v1847
    %v1850 = vlaneseq
    %v1851 = vshrl.u32 %v1850, 7
    %v1852 = vsub.s32 0, %v1851
    %v1853 = vrot.slane %v1848, %v1852
    %v1854 = vlaneseq
    %v1855 = vshrl.u32 %v1854, 7
    %v1856 = vsub.s32 0, %v1855
    %v1857 = vrot.slane %v1849, %v1856
    %v1871 = vunpack.c.l.b16 %v1834
    %v1872 = vunpack.c.h.b16 %v1834
    %v1873 = vunpack.c.l.b16 %v1835
    %v1874 = vunpack.c.h.b16 %v1835
    %v1875 = vunpack.c.l.b16 %v1836
    %v1876 = vunpack.c.h.b16 %v1836
    %v1877 = vunpack.c.l.b16 %v1837
    %v1878 = vunpack.c.h.b16 %v1837
    %v1879 = vunpack.c.l.b16 %v1838
    %v1880 = vunpack.c.h.b16 %v1838
    %v1881 = vunpack.c.l.b16 %v1839
    %v1882 = vunpack.c.h.b16 %v1839
    %v1883 = vunpack.c.l.b16 %v1840
    %v1884 = vunpack.c.h.b16 %v1840
    %v1885 = vunpack.c.l.b16 %v1841
    %v1886 = vunpack.c.h.b16 %v1841
    %v1887 = vunpack.c.l.b16 %v1842
    %v1888 = vunpack.c.h.b16 %v1842
    %v1889 = vunpack.c.l.b16 %v1843
    %v1890 = vunpack.c.h.b16 %v1843
    %v1891 = vunpack.c.l.b16 %v1844
    %v1892 = vunpack.c.h.b16 %v1844
    %v1893 = vunpack.c.l.b16 %v1845
    %v1894 = vunpack.c.h.b16 %v1845
    %v1895 = vunpack.c.l.b16 %v1846
    %v1896 = vunpack.c.h.b16 %v1846
    %v1897 = vpack.c.b16 %v1873, %v1871
    %v1898 = vpack.c.b16 %v1874, %v1872
    %v1899 = vpack.c.b16 %v1877, %v1875
    %v1900 = vpack.c.b16 %v1878, %v1876
    %v1901 = vpack.c.b16 %v1881, %v1879
    %v1902 = vpack.c.b16 %v1882, %v1880
    %v1903 = vpack.c.b16 %v1885, %v1883
    %v1904 = vpack.c.b16 %v1886, %v1884
    %v1905 = vpack.c.b16 %v1889, %v1887
    %v1906 = vpack.c.b16 %v1890, %v1888
    %v1907 = vpack.c.b16 %v1893, %v1891
    %v1908 = vpack.c.b16 %v1894, %v1892
    %v1909 = vpack.c.b16 %v1895, %v1895
    %v1910 = vpack.c.b16 %v1896, %v1896
    %vm1923 = vcmask 818176
    %v1925 = vsel %vm1923, %v1833, 0
    %vm1927 = vcmask 1041408
    %v1929 = vsel %vm1927, %v1909, 0
    %v1932 = vsel %vm1927, %v1910, 0
    %1934 = vmatprep.subr.bf16.mxu0 0
    %1935 = vmatpush1.bf16.msra.mxu0 0
    %1936 = vmatprep.subr.bf16.mxu0 %v1932
    %1937 = vmatpush1.bf16.msra.mxu0 %v1929
    %1938 = vmatprep.subr.bf16.mxu0 %v1908
    %1939 = vmatpush1.bf16.msra.mxu0 %v1907
    %1940 = vmatprep.subr.bf16.mxu0 %v1906
    %1941 = vmatpush1.bf16.msra.mxu0 %v1905
    %1942 = vmatprep.subr.bf16.mxu0 %v1904
    %1943 = vmatpush1.bf16.msra.mxu0 %v1903
    %1944 = vmatprep.subr.bf16.mxu0 %v1902
    %1945 = vmatpush1.bf16.msra.mxu0 %v1901
    %1946 = vmatprep.subr.bf16.mxu0 %v1900
    %1947 = vmatpush1.bf16.msra.mxu0 %v1899
    %1948 = vmatprep.subr.bf16.mxu0 %v1898
    %1949 = vmatpush1.bf16.msra.mxu0 %v1897
    %1950 = vmatprep.subr.bf16.mxu0 0
    %1951 = vmatpush2.bf16.msra.mxu0 0
    %1952 = vmatprep.subr.bf16.mxu0 0
    %1953 = vmatpush2.bf16.msra.mxu0 0
    %1954 = vmatprep.subr.bf16.mxu0 0
    %1955 = vmatpush2.bf16.msra.mxu0 0
    %1956 = vmatprep.subr.bf16.mxu0 0
    %1957 = vmatpush2.bf16.msra.mxu0 0
    %1958 = vmatprep.subr.bf16.mxu0 0
    %1959 = vmatpush2.bf16.msra.mxu0 0
    %1960 = vmatprep.subr.bf16.mxu0 0
    %1961 = vmatpush2.bf16.msra.mxu0 0
    %1962 = vmatprep.subr.bf16.mxu0 0
    %1963 = vmatpush2.bf16.msra.mxu0 0
    %1964 = vmatprep.subr.bf16.mxu0 0
    %1965 = vmatpush2.bf16.msra.mxu0 0
    %1966 = vmatprep.mubr.bf16.mxu0 0
    %1967 = vmatmul.mubr.bf16.gmra.mxu0 %v1925
    %v1968 = vpop.f32.mrf.mxu0
    %v1969 = vadd.f32 %v1853, %v1968
    %v1970 = vpop.f32.mrf.mxu0
    %v1971 = vadd.f32 %v1857, %v1970
    %v1972 = vpop.f32.mrf.mxu0
    %v1973 = vpop.f32.mrf.mxu0
    %1974 = vdwg.mxu0
    %v1975 = vmax.f32 %v1969, 0.0
    %v1976 = vmax.f32 %v1971, 0.0
    %v1977 = vpack.c.bf16 %v1975, %v1975
    %v1978 = vpack.c.bf16 %v1976, %v1976
    %v1979 = vld [vmem:[#allocation2 + $0x7b0] sm:$0xff]
    %v1980 = vld [vmem:[#allocation2 + $0x7b8] sm:$0xff]
    %v1981 = vld [vmem:[#allocation2 + $0x7c0] sm:$0xff]
    %v1982 = vld [vmem:[#allocation2 + $0x7c8] sm:$0xff]
    %v1983 = vld [vmem:[#allocation2 + $0x7d0] sm:$0xff]
    %v1984 = vld [vmem:[#allocation2 + $0x7d8] sm:$0xff]
    %v1985 = vld [vmem:[#allocation2 + $0x7e0] sm:$0xff]
    %v1986 = vld [vmem:[#allocation2 + $0x7e8] sm:$0xff]
    %v1987 = vld [vmem:[#allocation2 + $0x7f0] sm:$0xff]
    %v1988 = vld [vmem:[#allocation2 + $0x7f8] sm:$0xff]
    %v1989 = vld [vmem:[#allocation2 + $0x800] sm:$0xff]
    %v1990 = vld [vmem:[#allocation2 + $0x808] sm:$0xff]
    %v1991 = vld [vmem:[#allocation2 + $0x810] sm:$0xff]
    %v1992 = vld [vmem:[#allocation2 + $0x818] sm:$0xff]
    %v1993 = vld [vmem:[#allocation2 + $0x820] sm:$0xff]
    %v1994 = vld [vmem:[#allocation2 + $0x828] sm:$0xff]
    %v1995 = vld [vmem:[#allocation2 + $0x830] sm:$0xff]
    %v1996 = vld [vmem:[#allocation2 + $0x838] sm:$0xff]
    %v1997 = vld [vmem:[#allocation2 + $0x840] sm:$0xff]
    %v1998 = vld [vmem:[#allocation2 + $0x848] sm:$0xff]
    %v1999 = vld [vmem:[#allocation2 + $0x850] sm:$0xff]
    %v2000 = vld [vmem:[#allocation2 + $0x858] sm:$0xff]
    %v2001 = vld [vmem:[#allocation2 + $0x860] sm:$0xff]
    %v2002 = vld [vmem:[#allocation2 + $0x868] sm:$0xff]
    %v2003 = vld [vmem:[#allocation2 + $0x870] sm:$0xff]
    %v2004 = vld [vmem:[#allocation2 + $0x880] sm:$0x11]
    %v2005 = vunpack.c.l.bf16 %v2004
    %v2006 = vlaneseq
    %v2007 = vshrl.u32 %v2006, 7
    %v2008 = vsub.s32 0, %v2007
    %v2009 = vrot.slane %v2005, %v2008
    %v2035 = vunpack.c.l.b16 %v1979
    %v2036 = vunpack.c.h.b16 %v1979
    %v2037 = vunpack.c.l.b16 %v1980
    %v2038 = vunpack.c.h.b16 %v1980
    %v2039 = vunpack.c.l.b16 %v1981
    %v2040 = vunpack.c.h.b16 %v1981
    %v2041 = vunpack.c.l.b16 %v1982
    %v2042 = vunpack.c.h.b16 %v1982
    %v2043 = vunpack.c.l.b16 %v1983
    %v2044 = vunpack.c.h.b16 %v1983
    %v2045 = vunpack.c.l.b16 %v1984
    %v2046 = vunpack.c.h.b16 %v1984
    %v2047 = vunpack.c.l.b16 %v1985
    %v2048 = vunpack.c.h.b16 %v1985
    %v2049 = vunpack.c.l.b16 %v1986
    %v2050 = vunpack.c.h.b16 %v1986
    %v2051 = vunpack.c.l.b16 %v1987
    %v2052 = vunpack.c.h.b16 %v1987
    %v2053 = vunpack.c.l.b16 %v1988
    %v2054 = vunpack.c.h.b16 %v1988
    %v2055 = vunpack.c.l.b16 %v1989
    %v2056 = vunpack.c.h.b16 %v1989
    %v2057 = vunpack.c.l.b16 %v1990
    %v2058 = vunpack.c.h.b16 %v1990
    %v2059 = vunpack.c.l.b16 %v1991
    %v2060 = vunpack.c.h.b16 %v1991
    %v2061 = vunpack.c.l.b16 %v1992
    %v2062 = vunpack.c.h.b16 %v1992
    %v2063 = vunpack.c.l.b16 %v1993
    %v2064 = vunpack.c.h.b16 %v1993
    %v2065 = vunpack.c.l.b16 %v1994
    %v2066 = vunpack.c.h.b16 %v1994
    %v2067 = vunpack.c.l.b16 %v1995
    %v2068 = vunpack.c.h.b16 %v1995
    %v2069 = vunpack.c.l.b16 %v1996
    %v2070 = vunpack.c.h.b16 %v1996
    %v2071 = vunpack.c.l.b16 %v1997
    %v2072 = vunpack.c.h.b16 %v1997
    %v2073 = vunpack.c.l.b16 %v1998
    %v2074 = vunpack.c.h.b16 %v1998
    %v2075 = vunpack.c.l.b16 %v1999
    %v2076 = vunpack.c.h.b16 %v1999
    %v2077 = vunpack.c.l.b16 %v2000
    %v2078 = vunpack.c.h.b16 %v2000
    %v2079 = vunpack.c.l.b16 %v2001
    %v2080 = vunpack.c.h.b16 %v2001
    %v2081 = vunpack.c.l.b16 %v2002
    %v2082 = vunpack.c.h.b16 %v2002
    %v2083 = vunpack.c.l.b16 %v2003
    %v2084 = vunpack.c.h.b16 %v2003
    %v2085 = vpack.c.b16 %v2037, %v2035
    %v2086 = vpack.c.b16 %v2038, %v2036
    %v2087 = vpack.c.b16 %v2041, %v2039
    %v2088 = vpack.c.b16 %v2042, %v2040
    %v2089 = vpack.c.b16 %v2045, %v2043
    %v2090 = vpack.c.b16 %v2046, %v2044
    %v2091 = vpack.c.b16 %v2049, %v2047
    %v2092 = vpack.c.b16 %v2050, %v2048
    %v2093 = vpack.c.b16 %v2053, %v2051
    %v2094 = vpack.c.b16 %v2054, %v2052
    %v2095 = vpack.c.b16 %v2057, %v2055
    %v2096 = vpack.c.b16 %v2058, %v2056
    %v2097 = vpack.c.b16 %v2061, %v2059
    %v2098 = vpack.c.b16 %v2062, %v2060
    %v2099 = vpack.c.b16 %v2065, %v2063
    %v2100 = vpack.c.b16 %v2066, %v2064
    %v2101 = vpack.c.b16 %v2069, %v2067
    %v2102 = vpack.c.b16 %v2070, %v2068
    %v2103 = vpack.c.b16 %v2073, %v2071
    %v2104 = vpack.c.b16 %v2074, %v2072
    %v2105 = vpack.c.b16 %v2077, %v2075
    %v2106 = vpack.c.b16 %v2078, %v2076
    %v2107 = vpack.c.b16 %v2081, %v2079
    %v2108 = vpack.c.b16 %v2082, %v2080
    %v2109 = vpack.c.b16 %v2083, %v2083
    %v2110 = vpack.c.b16 %v2084, %v2084
    %v2136 = vsel %vm1781, %v1978, 0
    %v2139 = vsel %vm1785, %v2109, 0
    %v2142 = vsel %vm1785, %v2110, 0
    %2144 = vmatprep.subr.bf16.mxu0 %v2100
    %2145 = vmatpush1.bf16.msra.mxu0 %v2099
    %2146 = vmatprep.subr.bf16.mxu0 %v2098
    %2147 = vmatpush1.bf16.msra.mxu0 %v2097
    %2148 = vmatprep.subr.bf16.mxu0 %v2096
    %2149 = vmatpush1.bf16.msra.mxu0 %v2095
    %2150 = vmatprep.subr.bf16.mxu0 %v2094
    %2151 = vmatpush1.bf16.msra.mxu0 %v2093
    %2152 = vmatprep.subr.bf16.mxu0 %v2092
    %2153 = vmatpush1.bf16.msra.mxu0 %v2091
    %2154 = vmatprep.subr.bf16.mxu0 %v2090
    %2155 = vmatpush1.bf16.msra.mxu0 %v2089
    %2156 = vmatprep.subr.bf16.mxu0 %v2088
    %2157 = vmatpush1.bf16.msra.mxu0 %v2087
    %2158 = vmatprep.subr.bf16.mxu0 %v2086
    %2159 = vmatpush1.bf16.msra.mxu0 %v2085
    %2160 = vmatprep.subr.bf16.mxu0 0
    %2161 = vmatpush2.bf16.msra.mxu0 0
    %2162 = vmatprep.subr.bf16.mxu0 0
    %2163 = vmatpush2.bf16.msra.mxu0 0
    %2164 = vmatprep.subr.bf16.mxu0 0
    %2165 = vmatpush2.bf16.msra.mxu0 0
    %2166 = vmatprep.subr.bf16.mxu0 %v2142
    %2167 = vmatpush2.bf16.msra.mxu0 %v2139
    %2168 = vmatprep.subr.bf16.mxu0 %v2108
    %2169 = vmatpush2.bf16.msra.mxu0 %v2107
    %2170 = vmatprep.subr.bf16.mxu0 %v2106
    %2171 = vmatpush2.bf16.msra.mxu0 %v2105
    %2172 = vmatprep.subr.bf16.mxu0 %v2104
    %2173 = vmatpush2.bf16.msra.mxu0 %v2103
    %2174 = vmatprep.subr.bf16.mxu0 %v2102
    %2175 = vmatpush2.bf16.msra.mxu0 %v2101
    %2176 = vmatprep.mubr.bf16.mxu0 %v2136
    %2177 = vmatmul.mubr.bf16.gmra.mxu0 %v1977
    %v2178 = vpop.f32.mrf.mxu0
    %v2179 = vadd.f32 %v2009, %v2178
    %v2180 = vpop.f32.mrf.mxu0
    %v2181 = vpop.f32.mrf.mxu0
    %v2182 = vpop.f32.mrf.mxu0
    %2183 = vdwg.mxu0
    %v2184 = vmax.f32 %v2179, 0.0
    %v2185 = vpack.c.bf16 %v2184, %v2184
    %v2186 = vld [vmem:[#allocation2 + $0x890] sm:$0xff]
    %v2187 = vld [vmem:[#allocation2 + $0x8a0] sm:$0x11]
    %v2188 = vunpack.c.l.bf16 %v2187
    %v2189 = vlaneseq
    %v2190 = vshrl.u32 %v2189, 7
    %v2191 = vsub.s32 0, %v2190
    %v2192 = vrot.slane %v2188, %v2191
    %v2194 = vunpack.c.l.b16 %v2186
    %v2195 = vunpack.c.h.b16 %v2186
    %v2196 = vpack.c.b16 %v2194, %v2194
    %v2197 = vpack.c.b16 %v2195, %v2195
    %vm2198 = vcmask 64512
    %v2200 = vsel %vm2198, %v2185, 0
    %v2203 = vsel %vm1785, %v2196, 0
    %v2206 = vsel %vm1785, %v2197, 0
    %2208 = vmatprep.subr.bf16.mxu0 0
    %2209 = vmatpush1.bf16.msra.mxu0 0
    %2210 = vmatprep.subr.bf16.mxu0 0
    %2211 = vmatpush1.bf16.msra.mxu0 0
    %2212 = vmatprep.subr.bf16.mxu0 0
    %2213 = vmatpush1.bf16.msra.mxu0 0
    %2214 = vmatprep.subr.bf16.mxu0 0
    %2215 = vmatpush1.bf16.msra.mxu0 0
    %2216 = vmatprep.subr.bf16.mxu0 0
    %2217 = vmatpush1.bf16.msra.mxu0 0
    %2218 = vmatprep.subr.bf16.mxu0 0
    %2219 = vmatpush1.bf16.msra.mxu0 0
    %2220 = vmatprep.subr.bf16.mxu0 0
    %2221 = vmatpush1.bf16.msra.mxu0 0
    %2222 = vmatprep.subr.bf16.mxu0 %v2206
    %2223 = vmatpush1.bf16.msra.mxu0 %v2203
    %2224 = vmatprep.subr.bf16.mxu0 0
    %2225 = vmatpush2.bf16.msra.mxu0 0
    %2226 = vmatprep.subr.bf16.mxu0 0
    %2227 = vmatpush2.bf16.msra.mxu0 0
    %2228 = vmatprep.subr.bf16.mxu0 0
    %2229 = vmatpush2.bf16.msra.mxu0 0
    %2230 = vmatprep.subr.bf16.mxu0 0
    %2231 = vmatpush2.bf16.msra.mxu0 0
    %2232 = vmatprep.subr.bf16.mxu0 0
    %2233 = vmatpush2.bf16.msra.mxu0 0
    %2234 = vmatprep.subr.bf16.mxu0 0
    %2235 = vmatpush2.bf16.msra.mxu0 0
    %2236 = vmatprep.subr.bf16.mxu0 0
    %2237 = vmatpush2.bf16.msra.mxu0 0
    %2238 = vmatprep.subr.bf16.mxu0 0
    %2239 = vmatpush2.bf16.msra.mxu0 0
    %2240 = vmatprep.mubr.bf16.mxu0 0
    %2241 = vmatmul.mubr.bf16.gmra.mxu0 %v2200
    %v2242 = vpop.f32.mrf.mxu0
    %v2243 = vadd.f32 %v2192, %v2242
    %v2244 = vpop.f32.mrf.mxu0
    %v2245 = vpop.f32.mrf.mxu0
    %v2246 = vpop.f32.mrf.mxu0
    %2247 = vdwg.mxu0
    %2249 = vrot.lane.b32.xlu0 %v2243, 127
    %v2250 = vpop.permute.xlu0 %2249
    %v2252 = vsub.f32 %v2243, %v2250
    %v2253 = vmul.f32 %v2252, 1.442695
    %v2254 = vpow.pop %v2253
    %v2255 = vadd.f32 %v2254, 1.0
    %v2256 = vrcp.pop %v2255
    %v2257 = vmul.f32 1.0, %v2256
    %v2258 = vsub.f32 1.0, %v2257
    %vm2259 = vcmask 1024
    %2260 = vst.msk [vmem:[#allocation5] sm:$0x3] %vm2259, %v2258
    %2262 = vrot.lane.b32.xlu0 %v2257, 1
    %v2263 = vpop.permute.xlu0 %2262
    %vm2265 = vcmask 9224
    %2266 = vst.msk [vmem:[#allocation5] sm:$0x3] %vm2265, %v2263
    // Predicated region
    $region14: #{forward.1} parent=1 // pred_check
      _
    $region15: #{forward.1} parent=1 // pred_check_branch
      %2268 = sbr.rel (0) target = $region17
    $region16: #{forward.1} parent=1 // pred_region
      %s2270 = ssub.s32 32, 32
      %2271 = vsyncadd [#allocation4], %s2270
      %s2273 = sshll.u32 [#allocation5], 4
      %s2274 = int_to_ptr.vmem [resolvable:$true] %s2273
      %2276 = dma.vmem_to_hbm [thread:$0]  %s2274, 32, %s2, [#allocation4]
    $region17: #{forward.1} parent=1 // pred_fallthru
      _
    // Predicated region
    $region18: #{forward.1} parent=1 // pred_check
      _
    $region19: #{forward.1} parent=1 // pred_check_branch
      %2278 = sbr.rel (0) target = $region21
    $region20: #{forward.1} parent=1 // pred_region
      %2279 = dma.done [#allocation4], 32
    $region21: #{forward.1} parent=1 // pred_fallthru
      _
    %2280 = vsyncpa [#allocation3], 1
    %2281 = vsyncpa [#allocation4], 1

</llo_original>
